<compile_context>
chip_gen: v5e
topology: v5e:2x2
jax: 0.10.0
libtpu: 0.0.40
codegen_flags: <defaults>
</compile_context>

<pallas_src>
import math

import jax
import jax.numpy as jnp
from jax.experimental import pallas as pl
from jax.experimental.pallas import tpu as pltpu

# Small hyper-parameters consistent with ARGTransformer (scaled down).
VOCAB = 50
MAX_SEQ = 16
EMB = 32                 # embedding_dim, divisible by num_heads
HEADS = 8
HEAD_DIM = EMB // HEADS
LAYERS = 2
CLASSES = 1
LN_EPS = 1e-5
NEG_INF = -1e30          # stand-in for float('-inf') key-padding fill


def _make_kernel(tb, seq):
    """Build the kernel for a fixed samples-per-step (tb) and sequence length."""
    rows = tb * seq
    fdim = HEADS * seq            # "head*key" lane axis for block-diag attention

    def kernel(tok_ref, bias_ref, emb_ref, pos_ref,
               blockT_ref, segfh_ref, seghe_ref,
               wq_ref, wk_ref, wv_ref, bq_ref, bk_ref, bv_ref,
               wo_ref, bo_ref, lng_ref, lnb_ref, fcw_ref, fcb_ref, o_ref):
        f32 = jnp.float32
        bf16 = jnp.bfloat16

        # ---- embedding lookup as a one-hot matmul (row 0 of table is zeros) --
        tok = tok_ref[...]                                         # (rows, 1) i32
        lane = jax.lax.broadcasted_iota(jnp.int32, (rows, VOCAB), 1)
        onehot = (lane == tok).astype(bf16)                        # (rows, V)
        x = jax.lax.dot_general(onehot, emb_ref[...],
                                (((1,), (0,)), ((), ())),
                                preferred_element_type=f32)        # (rows, E)
        x = x + pos_ref[...]                                       # pre-tiled pos

        # loop-invariant reads (hoisted)
        key_bias = bias_ref[...]          # (tb, 1, H*S) f32 additive key bias
        blockT = blockT_ref[...]          # (H*S, E) f32  block-diag selector
        seg_fh = segfh_ref[...]           # (H*S, H) bf16 per-head sum selector
        seg_he = seghe_ref[...]           # (H, E)  f32  head -> lanes expander
        ln_g = lng_ref[...]
        ln_b = lnb_ref[...]

        for l in range(LAYERS):                                    # unrolled
            xb = x.astype(bf16)
            q = jax.lax.dot_general(xb, wq_ref[l], (((1,), (0,)), ((), ())),
                                    preferred_element_type=f32) + bq_ref[l]
            k = jax.lax.dot_general(xb, wk_ref[l], (((1,), (0,)), ((), ())),
                                    preferred_element_type=f32) + bk_ref[l]
            v = jax.lax.dot_general(xb, wv_ref[l], (((1,), (0,)), ((), ())),
                                    preferred_element_type=f32) + bv_ref[l]
            # (rows, E) -> (tb, S, E), reshapes done in f32
            q3 = q.reshape(tb, seq, EMB)
            k3 = k.reshape(tb, seq, EMB)
            v3 = v.reshape(tb, seq, EMB)

            # block-diagonal expansion: Kexp[b, h*S+j, e] = k[b, j, e] if
            # e // HEAD_DIM == h else 0 (same selector reused for V).
            k_rep = jnp.broadcast_to(k3[:, None, :, :],
                                     (tb, HEADS, seq, EMB)).reshape(tb, fdim, EMB)
            v_rep = jnp.broadcast_to(v3[:, None, :, :],
                                     (tb, HEADS, seq, EMB)).reshape(tb, fdim, EMB)
            kexp = (k_rep * blockT).astype(bf16)                   # (tb, H*S, E)
            vexp = (v_rep * blockT).astype(bf16)

            # all-head scores in one batched contraction (batch dim = sample)
            sc = jnp.einsum("bqe,bfe->bqf", q3.astype(bf16), kexp,
                            preferred_element_type=f32)            # (tb, S, H*S)
            sc = sc + key_bias                                     # broadcast over q
            # softmax is shift-invariant per head, so the global row max is a
            # valid (and overflow-safe) stabilizer for every head block.
            m = jnp.max(sc, axis=-1, keepdims=True)
            p = jnp.exp(sc - m)                                    # f32, unnormalized

            # unnormalized PV for all heads in one batched contraction
            pv = jnp.einsum("bqf,bfe->bqe", p.astype(bf16), vexp,
                            preferred_element_type=f32)            # (tb, S, E)

            # per-head softmax denominators, expanded to each head's E lanes
            p2 = p.reshape(rows, fdim).astype(bf16)
            den = jax.lax.dot_general(p2, seg_fh, (((1,), (0,)), ((), ())),
                                      preferred_element_type=f32)  # (rows, H)
            den_e = jax.lax.dot_general(den, seg_he, (((1,), (0,)), ((), ())),
                                        preferred_element_type=f32)  # (rows, E)
            attn = pv.reshape(rows, EMB) * pl.reciprocal(den_e, approx=True)

            out = jax.lax.dot_general(attn.astype(bf16), wo_ref[l],
                                      (((1,), (0,)), ((), ())),
                                      preferred_element_type=f32) + bo_ref[l]
            y = out + x                                            # residual
            mu = jnp.mean(y, axis=-1, keepdims=True)
            var = jnp.mean((y - mu) ** 2, axis=-1, keepdims=True)
            x = (y - mu) * jax.lax.rsqrt(var + LN_EPS) * ln_g + ln_b

        xm = jnp.mean(x.reshape(tb, seq, EMB), axis=1)             # (tb, E)
        # lane-dense logits block: (CLASSES, tb)
        logits = jax.lax.dot_general(fcw_ref[...], xm.astype(bf16),
                                     (((1,), (1,)), ((), ())),
                                     preferred_element_type=f32) + fcb_ref[...]
        o_ref[0] = logits

    return kernel


def arg_transformer_forward(tokens, attention_mask, params, samples_per_step=None):
    B, S = tokens.shape
    if samples_per_step is None:
        # One grid step for small/medium batches (best on single-TC chips and
        # removes all per-step overhead); for huge batches cap rows per step
        # at 1024 to keep the per-step slab small (tune to 2 steps on v7x).
        tb = B if B * S <= 1024 else max(1, 1024 // S)
    else:
        tb = int(samples_per_step)
    tb = max(1, min(tb, B))
    n_steps = pl.cdiv(B, tb)
    B_pad = n_steps * tb

    tok = tokens.astype(jnp.int32)
    msk = attention_mask.astype(jnp.float32)
    if B_pad != B:
        tok = jnp.concatenate([tok, jnp.zeros((B_pad - B, S), jnp.int32)], axis=0)
        # padded samples get an all-ones mask (keeps softmax finite); discarded later
        msk = jnp.concatenate([msk, jnp.ones((B_pad - B, S), jnp.float32)], axis=0)
    tok_rows = tok.reshape(B_pad * S, 1)
    # additive key-padding bias, pre-tiled across heads: (B_pad, 1, H*S)
    key_bias = jnp.where(msk == 0.0, NEG_INF, 0.0).astype(jnp.float32)
    key_bias = jnp.tile(key_bias[:, None, :], (1, 1, HEADS))

    # constant selectors for the block-diagonal head batching
    f_idx = jnp.arange(HEADS * S)[:, None]
    e_idx = jnp.arange(EMB)[None, :]
    block_t = (f_idx // S == e_idx // HEAD_DIM).astype(jnp.float32)      # (H*S, E)
    seg_fh = (f_idx // S == jnp.arange(HEADS)[None, :]).astype(jnp.bfloat16)
    seg_he = (jnp.arange(HEADS)[:, None] == e_idx // HEAD_DIM).astype(jnp.float32)

    scale = 1.0 / math.sqrt(HEAD_DIM)
    emb = params["embedding"].astype(jnp.bfloat16)                       # (V, E)
    pos = params["pos"][0, :S, :].astype(jnp.float32)                    # (S, E)
    pos_tiled = jnp.tile(pos, (tb, 1))                                   # (tb*S, E)
    in_w = params["in_proj_w"]                                           # (L, 3E, E)
    in_b = params["in_proj_b"]                                           # (L, 3E)
    wq_t = (in_w[:, :EMB, :] * scale).transpose(0, 2, 1).astype(jnp.bfloat16)
    wk_t = in_w[:, EMB:2 * EMB, :].transpose(0, 2, 1).astype(jnp.bfloat16)
    wv_t = in_w[:, 2 * EMB:, :].transpose(0, 2, 1).astype(jnp.bfloat16)
    bq = (in_b[:, :EMB] * scale).reshape(LAYERS, 1, EMB).astype(jnp.float32)
    bk = in_b[:, EMB:2 * EMB].reshape(LAYERS, 1, EMB).astype(jnp.float32)
    bv = in_b[:, 2 * EMB:].reshape(LAYERS, 1, EMB).astype(jnp.float32)
    wo_t = params["out_proj_w"].transpose(0, 2, 1).astype(jnp.bfloat16)  # (L, E, E)
    bo = params["out_proj_b"].reshape(LAYERS, 1, EMB).astype(jnp.float32)
    ln_g = params["ln_gamma"].reshape(1, EMB).astype(jnp.float32)
    ln_b = params["ln_beta"].reshape(1, EMB).astype(jnp.float32)
    fc_w = params["fc_w"].astype(jnp.bfloat16)                           # (C, E)
    fc_b = params["fc_b"].reshape(CLASSES, 1).astype(jnp.float32)

    const2 = lambda b: (0, 0)
    const3 = lambda b: (0, 0, 0)
    kernel = _make_kernel(tb, S)
    out = pl.pallas_call(
        kernel,
        out_shape=jax.ShapeDtypeStruct((n_steps, CLASSES, tb), jnp.float32),
        grid_spec=pltpu.PrefetchScalarGridSpec(
            num_scalar_prefetch=0,
            grid=(n_steps,),
            in_specs=[
                pl.BlockSpec((tb * S, 1), lambda b: (b, 0)),              # tokens
                pl.BlockSpec((tb, 1, HEADS * S), lambda b: (b, 0, 0)),    # key bias
                pl.BlockSpec((VOCAB, EMB), const2),                       # emb table
                pl.BlockSpec((tb * S, EMB), const2),                      # pos (tiled)
                pl.BlockSpec((HEADS * S, EMB), const2),                   # blockT
                pl.BlockSpec((HEADS * S, HEADS), const2),                 # seg_fh
                pl.BlockSpec((HEADS, EMB), const2),                       # seg_he
                pl.BlockSpec((LAYERS, EMB, EMB), const3),                 # wq
                pl.BlockSpec((LAYERS, EMB, EMB), const3),                 # wk
                pl.BlockSpec((LAYERS, EMB, EMB), const3),                 # wv
                pl.BlockSpec((LAYERS, 1, EMB), const3),                   # bq
                pl.BlockSpec((LAYERS, 1, EMB), const3),                   # bk
                pl.BlockSpec((LAYERS, 1, EMB), const3),                   # bv
                pl.BlockSpec((LAYERS, EMB, EMB), const3),                 # wo
                pl.BlockSpec((LAYERS, 1, EMB), const3),                   # bo
                pl.BlockSpec((1, EMB), const2),                           # ln gamma
                pl.BlockSpec((1, EMB), const2),                           # ln beta
                pl.BlockSpec((CLASSES, EMB), const2),                     # fc w
                pl.BlockSpec((CLASSES, 1), const2),                       # fc b
            ],
            out_specs=pl.BlockSpec((1, CLASSES, tb), lambda b: (b, 0, 0)),
        ),
        compiler_params=pltpu.CompilerParams(dimension_semantics=("parallel",)),
    )(tok_rows, key_bias, emb, pos_tiled, block_t, seg_fh, seg_he,
      wq_t, wk_t, wv_t, bq, bk, bv, wo_t, bo, ln_g, ln_b, fc_w, fc_b)

    # (n_steps, C, tb) -> (B, C)
    return out.transpose(0, 2, 1).reshape(B_pad, CLASSES)[:B]


def ref_forward(tokens, attention_mask, params):
    """Pure-JAX f32 reference mirroring the PyTorch forward (eval mode)."""
    B, S = tokens.shape
    x = params["embedding"][tokens] + params["pos"][:, :S, :]
    bias = jnp.where(attention_mask[:, None, None, :] == 0, NEG_INF, 0.0)
    for l in range(LAYERS):
        qkv = jnp.einsum("bse,fe->bsf", x, params["in_proj_w"][l]) + params["in_proj_b"][l]
        q, k, v = jnp.split(qkv, 3, axis=-1)

        def heads(t):
            return t.reshape(B, S, HEADS, HEAD_DIM).transpose(0, 2, 1, 3)

        qh, kh, vh = heads(q), heads(k), heads(v)
        sc = jnp.einsum("bhqd,bhkd->bhqk", qh, kh) / math.sqrt(HEAD_DIM) + bias
        p = jax.nn.softmax(sc, axis=-1)
        o = jnp.einsum("bhqk,bhkd->bhqd", p, vh).transpose(0, 2, 1, 3).reshape(B, S, EMB)
        o = jnp.einsum("bse,fe->bsf", o, params["out_proj_w"][l]) + params["out_proj_b"][l]
        y = o + x
        mu = y.mean(-1, keepdims=True)
        var = ((y - mu) ** 2).mean(-1, keepdims=True)
        x = (y - mu) / jnp.sqrt(var + LN_EPS) * params["ln_gamma"] + params["ln_beta"]
    xm = x.mean(axis=1)
    return xm @ params["fc_w"].T + params["fc_b"]


def init_params(key):
    ks = jax.random.split(key, 8)
    emb = jax.random.normal(ks[0], (VOCAB, EMB), jnp.float32) * 0.02
    emb = emb.at[0].set(0.0)                                      # padding_idx=0
    pos = jax.random.normal(ks[1], (1, MAX_SEQ, EMB), jnp.float32)
    in_w = jax.random.normal(ks[2], (LAYERS, 3 * EMB, EMB), jnp.float32) * 0.05
    in_b = jax.random.normal(ks[3], (LAYERS, 3 * EMB), jnp.float32) * 0.02
    out_w = jax.random.normal(ks[4], (LAYERS, EMB, EMB), jnp.float32) * 0.05
    out_b = jax.random.normal(ks[5], (LAYERS, EMB), jnp.float32) * 0.02
    ln_g = jnp.ones((EMB,), jnp.float32)
    ln_b = jnp.zeros((EMB,), jnp.float32)
    fc_w = jax.random.normal(ks[6], (CLASSES, EMB), jnp.float32) * 0.05
    fc_b = jnp.zeros((CLASSES,), jnp.float32)
    return dict(embedding=emb, pos=pos, in_proj_w=in_w, in_proj_b=in_b,
                out_proj_w=out_w, out_proj_b=out_b,
                ln_gamma=ln_g, ln_beta=ln_b, fc_w=fc_w, fc_b=fc_b)


if __name__ == "__main__":
    key = jax.random.PRNGKey(0)
    pkey, tkey = jax.random.split(key)
    params = init_params(pkey)

    # B=4, S=8 runs as a single grid step (tb = 4, rows = 32).
    B, S = 4, 8
    lengths = jnp.array([8, 5, 3, 6], jnp.int32)
    pos_idx = jnp.arange(S)[None, :]
    attention_mask = (pos_idx < lengths[:, None]).astype(jnp.int32)   # 1=token, 0=pad
    tokens = jax.random.randint(tkey, (B, S), 1, VOCAB)
    tokens = jnp.where(attention_mask == 1, tokens, 0)

    logits = jax.block_until_ready(
        arg_transformer_forward(tokens, attention_mask, params))
    expected = ref_forward(tokens, attention_mask, params)

    assert logits.shape == (B, CLASSES)
    # tolerance covers bf16 matmul operands + approx (EUP) softmax reciprocal
    assert jnp.allclose(logits, expected, atol=2e-2, rtol=2e-2), (logits, expected)
    print("KERNEL_OK")
</pallas_src>

<mosaic_0001>
module attributes {stable_mosaic.version = 11 : i64} {
  func.func @kernel(%arg0: i32, %arg1: memref<32x1xi32, #tpu.memory_space<vmem>>, %arg2: memref<4x1x64xf32, #tpu.memory_space<vmem>>, %arg3: memref<50x32xbf16, #tpu.memory_space<vmem>>, %arg4: memref<32x32xf32, #tpu.memory_space<vmem>>, %arg5: memref<64x32xf32, #tpu.memory_space<vmem>>, %arg6: memref<64x8xbf16, #tpu.memory_space<vmem>>, %arg7: memref<8x32xf32, #tpu.memory_space<vmem>>, %arg8: memref<2x32x32xbf16, #tpu.memory_space<vmem>>, %arg9: memref<2x32x32xbf16, #tpu.memory_space<vmem>>, %arg10: memref<2x32x32xbf16, #tpu.memory_space<vmem>>, %arg11: memref<2x1x32xf32, #tpu.memory_space<vmem>>, %arg12: memref<2x1x32xf32, #tpu.memory_space<vmem>>, %arg13: memref<2x1x32xf32, #tpu.memory_space<vmem>>, %arg14: memref<2x32x32xbf16, #tpu.memory_space<vmem>>, %arg15: memref<2x1x32xf32, #tpu.memory_space<vmem>>, %arg16: memref<1x32xf32, #tpu.memory_space<vmem>>, %arg17: memref<1x32xf32, #tpu.memory_space<vmem>>, %arg18: memref<1x32xbf16, #tpu.memory_space<vmem>>, %arg19: memref<1x1xf32, #tpu.memory_space<vmem>>, %arg20: memref<1x1x4xf32, #tpu.memory_space<vmem>>) attributes {dimension_semantics = [#tpu.dimension_semantics<parallel>], iteration_bounds = array<i64: 1>, scalar_prefetch = 0 : i64, scratch_operands = 0 : i64, tpu.core_type = #tpu.core_type<tc>, window_params = [{transform_indices = @transform_0, window_bounds = array<i64: 32, 1>}, {transform_indices = @transform_1, window_bounds = array<i64: 4, 1, 64>}, {pipeline_mode = #tpu.pipeline_mode<synchronous>, transform_indices = @transform_2, window_bounds = array<i64: 50, 32>}, {pipeline_mode = #tpu.pipeline_mode<synchronous>, transform_indices = @transform_3, window_bounds = array<i64: 32, 32>}, {pipeline_mode = #tpu.pipeline_mode<synchronous>, transform_indices = @transform_4, window_bounds = array<i64: 64, 32>}, {pipeline_mode = #tpu.pipeline_mode<synchronous>, transform_indices = @transform_5, window_bounds = array<i64: 64, 8>}, {pipeline_mode = #tpu.pipeline_mode<synchronous>, transform_indices = @transform_6, window_bounds = array<i64: 8, 32>}, {pipeline_mode = #tpu.pipeline_mode<synchronous>, transform_indices = @transform_7, window_bounds = array<i64: 2, 32, 32>}, {pipeline_mode = #tpu.pipeline_mode<synchronous>, transform_indices = @transform_8, window_bounds = array<i64: 2, 32, 32>}, {pipeline_mode = #tpu.pipeline_mode<synchronous>, transform_indices = @transform_9, window_bounds = array<i64: 2, 32, 32>}, {pipeline_mode = #tpu.pipeline_mode<synchronous>, transform_indices = @transform_10, window_bounds = array<i64: 2, 1, 32>}, {pipeline_mode = #tpu.pipeline_mode<synchronous>, transform_indices = @transform_11, window_bounds = array<i64: 2, 1, 32>}, {pipeline_mode = #tpu.pipeline_mode<synchronous>, transform_indices = @transform_12, window_bounds = array<i64: 2, 1, 32>}, {pipeline_mode = #tpu.pipeline_mode<synchronous>, transform_indices = @transform_13, window_bounds = array<i64: 2, 32, 32>}, {pipeline_mode = #tpu.pipeline_mode<synchronous>, transform_indices = @transform_14, window_bounds = array<i64: 2, 1, 32>}, {pipeline_mode = #tpu.pipeline_mode<synchronous>, transform_indices = @transform_15, window_bounds = array<i64: 1, 32>}, {pipeline_mode = #tpu.pipeline_mode<synchronous>, transform_indices = @transform_16, window_bounds = array<i64: 1, 32>}, {pipeline_mode = #tpu.pipeline_mode<synchronous>, transform_indices = @transform_17, window_bounds = array<i64: 1, 32>}, {pipeline_mode = #tpu.pipeline_mode<synchronous>, transform_indices = @transform_18, window_bounds = array<i64: 1, 1>}, {transform_indices = @transform_19, window_bounds = array<i64: 1, 1, 4>}]} {
    %c0 = arith.constant 0 : index
    %c0_0 = arith.constant 0 : index
    %0 = vector.load %arg1[%c0, %c0_0] : memref<32x1xi32, #tpu.memory_space<vmem>>, vector<32x1xi32>
    %1 = tpu.iota {dimensions = array<i32: 1>} : vector<32x50xi32>
    %2 = vector.broadcast %0 : vector<32x1xi32> to vector<32x50xi32>
    %3 = arith.cmpi eq, %1, %2 : vector<32x50xi32>
    %4 = arith.extui %3 : vector<32x50xi1> to vector<32x50xi32>
    %5 = arith.sitofp %4 : vector<32x50xi32> to vector<32x50xf32>
    %6 = arith.truncf %5 : vector<32x50xf32> to vector<32x50xbf16>
    %c0_1 = arith.constant 0 : index
    %c0_2 = arith.constant 0 : index
    %7 = vector.load %arg3[%c0_1, %c0_2] : memref<50x32xbf16, #tpu.memory_space<vmem>>, vector<50x32xbf16>
    %cst = arith.constant dense<0.000000e+00> : vector<32x32xf32>
    %8 = tpu.matmul %6, %7, %cst {dimension_numbers = #tpu.dot_dimension_numbers<[1], [0], [0], [1], [0, 0, 1, 1], [], []>} : vector<32x50xbf16>, vector<50x32xbf16>, vector<32x32xf32> -> vector<32x32xf32>
    %c0_3 = arith.constant 0 : index
    %c0_4 = arith.constant 0 : index
    %9 = vector.load %arg4[%c0_3, %c0_4] : memref<32x32xf32, #tpu.memory_space<vmem>>, vector<32x32xf32>
    %10 = arith.addf %8, %9 : vector<32x32xf32>
    %c0_5 = arith.constant 0 : index
    %c0_6 = arith.constant 0 : index
    %c0_7 = arith.constant 0 : index
    %11 = vector.load %arg2[%c0_5, %c0_6, %c0_7] : memref<4x1x64xf32, #tpu.memory_space<vmem>>, vector<4x1x64xf32>
    %c0_8 = arith.constant 0 : index
    %c0_9 = arith.constant 0 : index
    %12 = vector.load %arg5[%c0_8, %c0_9] : memref<64x32xf32, #tpu.memory_space<vmem>>, vector<64x32xf32>
    %c0_10 = arith.constant 0 : index
    %c0_11 = arith.constant 0 : index
    %13 = vector.load %arg6[%c0_10, %c0_11] : memref<64x8xbf16, #tpu.memory_space<vmem>>, vector<64x8xbf16>
    %c0_12 = arith.constant 0 : index
    %c0_13 = arith.constant 0 : index
    %14 = vector.load %arg7[%c0_12, %c0_13] : memref<8x32xf32, #tpu.memory_space<vmem>>, vector<8x32xf32>
    %c0_14 = arith.constant 0 : index
    %c0_15 = arith.constant 0 : index
    %15 = vector.load %arg16[%c0_14, %c0_15] : memref<1x32xf32, #tpu.memory_space<vmem>>, vector<1x32xf32>
    %c0_16 = arith.constant 0 : index
    %c0_17 = arith.constant 0 : index
    %16 = vector.load %arg17[%c0_16, %c0_17] : memref<1x32xf32, #tpu.memory_space<vmem>>, vector<1x32xf32>
    %17 = arith.truncf %10 : vector<32x32xf32> to vector<32x32xbf16>
    %c0_18 = arith.constant 0 : index
    %c0_19 = arith.constant 0 : index
    %c0_20 = arith.constant 0 : index
    %18 = vector.load %arg8[%c0_18, %c0_19, %c0_20] : memref<2x32x32xbf16, #tpu.memory_space<vmem>>, vector<1x32x32xbf16>
    %19 = vector.shape_cast %18 : vector<1x32x32xbf16> to vector<32x32xbf16>
    %cst_21 = arith.constant dense<0.000000e+00> : vector<32x32xf32>
    %20 = tpu.matmul %17, %19, %cst_21 {dimension_numbers = #tpu.dot_dimension_numbers<[1], [0], [0], [1], [0, 0, 1, 1], [], []>} : vector<32x32xbf16>, vector<32x32xbf16>, vector<32x32xf32> -> vector<32x32xf32>
    %c0_22 = arith.constant 0 : index
    %c0_23 = arith.constant 0 : index
    %c0_24 = arith.constant 0 : index
    %21 = vector.load %arg11[%c0_22, %c0_23, %c0_24] : memref<2x1x32xf32, #tpu.memory_space<vmem>>, vector<1x1x32xf32>
    %22 = vector.shape_cast %21 : vector<1x1x32xf32> to vector<1x32xf32>
    %23 = vector.broadcast %22 : vector<1x32xf32> to vector<32x32xf32>
    %24 = arith.addf %20, %23 : vector<32x32xf32>
    %c0_25 = arith.constant 0 : index
    %c0_26 = arith.constant 0 : index
    %c0_27 = arith.constant 0 : index
    %25 = vector.load %arg9[%c0_25, %c0_26, %c0_27] : memref<2x32x32xbf16, #tpu.memory_space<vmem>>, vector<1x32x32xbf16>
    %26 = vector.shape_cast %25 : vector<1x32x32xbf16> to vector<32x32xbf16>
    %cst_28 = arith.constant dense<0.000000e+00> : vector<32x32xf32>
    %27 = tpu.matmul %17, %26, %cst_28 {dimension_numbers = #tpu.dot_dimension_numbers<[1], [0], [0], [1], [0, 0, 1, 1], [], []>} : vector<32x32xbf16>, vector<32x32xbf16>, vector<32x32xf32> -> vector<32x32xf32>
    %c0_29 = arith.constant 0 : index
    %c0_30 = arith.constant 0 : index
    %c0_31 = arith.constant 0 : index
    %28 = vector.load %arg12[%c0_29, %c0_30, %c0_31] : memref<2x1x32xf32, #tpu.memory_space<vmem>>, vector<1x1x32xf32>
    %29 = vector.shape_cast %28 : vector<1x1x32xf32> to vector<1x32xf32>
    %30 = vector.broadcast %29 : vector<1x32xf32> to vector<32x32xf32>
    %31 = arith.addf %27, %30 : vector<32x32xf32>
    %c0_32 = arith.constant 0 : index
    %c0_33 = arith.constant 0 : index
    %c0_34 = arith.constant 0 : index
    %32 = vector.load %arg10[%c0_32, %c0_33, %c0_34] : memref<2x32x32xbf16, #tpu.memory_space<vmem>>, vector<1x32x32xbf16>
    %33 = vector.shape_cast %32 : vector<1x32x32xbf16> to vector<32x32xbf16>
    %cst_35 = arith.constant dense<0.000000e+00> : vector<32x32xf32>
    %34 = tpu.matmul %17, %33, %cst_35 {dimension_numbers = #tpu.dot_dimension_numbers<[1], [0], [0], [1], [0, 0, 1, 1], [], []>} : vector<32x32xbf16>, vector<32x32xbf16>, vector<32x32xf32> -> vector<32x32xf32>
    %c0_36 = arith.constant 0 : index
    %c0_37 = arith.constant 0 : index
    %c0_38 = arith.constant 0 : index
    %35 = vector.load %arg13[%c0_36, %c0_37, %c0_38] : memref<2x1x32xf32, #tpu.memory_space<vmem>>, vector<1x1x32xf32>
    %36 = vector.shape_cast %35 : vector<1x1x32xf32> to vector<1x32xf32>
    %37 = vector.broadcast %36 : vector<1x32xf32> to vector<32x32xf32>
    %38 = arith.addf %34, %37 : vector<32x32xf32>
    %39 = vector.shape_cast %24 : vector<32x32xf32> to vector<4x8x32xf32>
    %40 = vector.shape_cast %31 : vector<32x32xf32> to vector<4x8x32xf32>
    %41 = vector.shape_cast %38 : vector<32x32xf32> to vector<4x8x32xf32>
    %42 = vector.shape_cast %40 : vector<4x8x32xf32> to vector<4x1x8x32xf32>
    %43 = vector.shape_cast %42 : vector<4x1x8x32xf32> to vector<4x1x8x32xf32>
    %44 = vector.broadcast %43 : vector<4x1x8x32xf32> to vector<4x8x8x32xf32>
    %45 = vector.shape_cast %44 : vector<4x8x8x32xf32> to vector<4x64x32xf32>
    %46 = vector.shape_cast %41 : vector<4x8x32xf32> to vector<4x1x8x32xf32>
    %47 = vector.shape_cast %46 : vector<4x1x8x32xf32> to vector<4x1x8x32xf32>
    %48 = vector.broadcast %47 : vector<4x1x8x32xf32> to vector<4x8x8x32xf32>
    %49 = vector.shape_cast %48 : vector<4x8x8x32xf32> to vector<4x64x32xf32>
    %50 = vector.shape_cast %12 : vector<64x32xf32> to vector<1x64x32xf32>
    %51 = vector.broadcast %50 : vector<1x64x32xf32> to vector<4x64x32xf32>
    %52 = arith.mulf %45, %51 : vector<4x64x32xf32>
    %53 = arith.truncf %52 : vector<4x64x32xf32> to vector<4x64x32xbf16>
    %54 = vector.shape_cast %12 : vector<64x32xf32> to vector<1x64x32xf32>
    %55 = vector.broadcast %54 : vector<1x64x32xf32> to vector<4x64x32xf32>
    %56 = arith.mulf %49, %55 : vector<4x64x32xf32>
    %57 = arith.truncf %56 : vector<4x64x32xf32> to vector<4x64x32xbf16>
    %58 = arith.truncf %39 : vector<4x8x32xf32> to vector<4x8x32xbf16>
    "tpu.trace_start"() <{level = 10 : i32, message = "bqe,bfe->bqf"}> : () -> ()
    %cst_39 = arith.constant dense<0.000000e+00> : vector<4x8x64xf32>
    %59 = tpu.matmul %58, %53, %cst_39 {dimension_numbers = #tpu.dot_dimension_numbers<[2], [2], [1], [1], [0, 0, 0, 1, 1, 1], [0], [0]>} : vector<4x8x32xbf16>, vector<4x64x32xbf16>, vector<4x8x64xf32> -> vector<4x8x64xf32>
    "tpu.trace_stop"() : () -> ()
    %60 = vector.broadcast %11 : vector<4x1x64xf32> to vector<4x8x64xf32>
    %61 = arith.addf %59, %60 : vector<4x8x64xf32>
    %cst_40 = arith.constant dense<0xFF800000> : vector<4x8xf32>
    %62 = vector.multi_reduction <maximumf>, %61, %cst_40 [2] : vector<4x8x64xf32> to vector<4x8xf32>
    %63 = vector.shape_cast %62 : vector<4x8xf32> to vector<4x8x1xf32>
    %64 = vector.broadcast %63 : vector<4x8x1xf32> to vector<4x8x64xf32>
    %65 = arith.subf %61, %64 : vector<4x8x64xf32>
    %66 = math.exp %65 : vector<4x8x64xf32>
    %67 = arith.truncf %66 : vector<4x8x64xf32> to vector<4x8x64xbf16>
    "tpu.trace_start"() <{level = 10 : i32, message = "bqf,bfe->bqe"}> : () -> ()
    %cst_41 = arith.constant dense<0.000000e+00> : vector<4x8x32xf32>
    %68 = tpu.matmul %67, %57, %cst_41 {dimension_numbers = #tpu.dot_dimension_numbers<[2], [1], [1], [2], [0, 0, 0, 1, 1, 2], [0], [0]>} : vector<4x8x64xbf16>, vector<4x64x32xbf16>, vector<4x8x32xf32> -> vector<4x8x32xf32>
    "tpu.trace_stop"() : () -> ()
    %69 = vector.shape_cast %66 : vector<4x8x64xf32> to vector<32x64xf32>
    %70 = arith.truncf %69 : vector<32x64xf32> to vector<32x64xbf16>
    %cst_42 = arith.constant dense<0.000000e+00> : vector<32x8xf32>
    %71 = tpu.matmul %70, %13, %cst_42 {dimension_numbers = #tpu.dot_dimension_numbers<[1], [0], [0], [1], [0, 0, 1, 1], [], []>} : vector<32x64xbf16>, vector<64x8xbf16>, vector<32x8xf32> -> vector<32x8xf32>
    %cst_43 = arith.constant dense<0.000000e+00> : vector<32x32xf32>
    %72 = tpu.matmul %71, %14, %cst_43 {dimension_numbers = #tpu.dot_dimension_numbers<[1], [0], [0], [1], [0, 0, 1, 1], [], []>} : vector<32x8xf32>, vector<8x32xf32>, vector<32x32xf32> -> vector<32x32xf32>
    %73 = vector.shape_cast %68 : vector<4x8x32xf32> to vector<32x32xf32>
    %74 = tpu.reciprocal %72 {approx = true} : vector<32x32xf32> -> vector<32x32xf32>
    %75 = arith.mulf %73, %74 : vector<32x32xf32>
    %76 = arith.truncf %75 : vector<32x32xf32> to vector<32x32xbf16>
    %c0_44 = arith.constant 0 : index
    %c0_45 = arith.constant 0 : index
    %c0_46 = arith.constant 0 : index
    %77 = vector.load %arg14[%c0_44, %c0_45, %c0_46] : memref<2x32x32xbf16, #tpu.memory_space<vmem>>, vector<1x32x32xbf16>
    %78 = vector.shape_cast %77 : vector<1x32x32xbf16> to vector<32x32xbf16>
    %cst_47 = arith.constant dense<0.000000e+00> : vector<32x32xf32>
    %79 = tpu.matmul %76, %78, %cst_47 {dimension_numbers = #tpu.dot_dimension_numbers<[1], [0], [0], [1], [0, 0, 1, 1], [], []>} : vector<32x32xbf16>, vector<32x32xbf16>, vector<32x32xf32> -> vector<32x32xf32>
    %c0_48 = arith.constant 0 : index
    %c0_49 = arith.constant 0 : index
    %c0_50 = arith.constant 0 : index
    %80 = vector.load %arg15[%c0_48, %c0_49, %c0_50] : memref<2x1x32xf32, #tpu.memory_space<vmem>>, vector<1x1x32xf32>
    %81 = vector.shape_cast %80 : vector<1x1x32xf32> to vector<1x32xf32>
    %82 = vector.broadcast %81 : vector<1x32xf32> to vector<32x32xf32>
    %83 = arith.addf %79, %82 : vector<32x32xf32>
    %84 = arith.addf %83, %10 : vector<32x32xf32>
    %cst_51 = arith.constant dense<0.000000e+00> : vector<32xf32>
    %85 = vector.multi_reduction <add>, %84, %cst_51 [1] : vector<32x32xf32> to vector<32xf32>
    %86 = vector.shape_cast %85 : vector<32xf32> to vector<32x1xf32>
    %cst_52 = arith.constant 3.200000e+01 : f32
    %87 = vector.broadcast %cst_52 : f32 to vector<32x1xf32>
    %88 = arith.divf %86, %87 : vector<32x1xf32>
    %89 = vector.broadcast %88 : vector<32x1xf32> to vector<32x32xf32>
    %90 = arith.subf %84, %89 : vector<32x32xf32>
    %91 = arith.mulf %90, %90 : vector<32x32xf32>
    %cst_53 = arith.constant dense<0.000000e+00> : vector<32xf32>
    %92 = vector.multi_reduction <add>, %91, %cst_53 [1] : vector<32x32xf32> to vector<32xf32>
    %93 = vector.shape_cast %92 : vector<32xf32> to vector<32x1xf32>
    %cst_54 = arith.constant 3.200000e+01 : f32
    %94 = vector.broadcast %cst_54 : f32 to vector<32x1xf32>
    %95 = arith.divf %93, %94 : vector<32x1xf32>
    %96 = vector.broadcast %88 : vector<32x1xf32> to vector<32x32xf32>
    %97 = arith.subf %84, %96 : vector<32x32xf32>
    %cst_55 = arith.constant 9.99999974E-6 : f32
    %98 = vector.broadcast %cst_55 : f32 to vector<32x1xf32>
    %99 = arith.addf %95, %98 : vector<32x1xf32>
    %100 = math.rsqrt %99 : vector<32x1xf32>
    %101 = vector.broadcast %100 : vector<32x1xf32> to vector<32x32xf32>
    %102 = arith.mulf %97, %101 : vector<32x32xf32>
    %103 = vector.broadcast %15 : vector<1x32xf32> to vector<32x32xf32>
    %104 = arith.mulf %102, %103 : vector<32x32xf32>
    %105 = vector.broadcast %16 : vector<1x32xf32> to vector<32x32xf32>
    %106 = arith.addf %104, %105 : vector<32x32xf32>
    %107 = arith.truncf %106 : vector<32x32xf32> to vector<32x32xbf16>
    %c1 = arith.constant 1 : index
    %c0_56 = arith.constant 0 : index
    %c0_57 = arith.constant 0 : index
    %108 = vector.load %arg8[%c1, %c0_56, %c0_57] : memref<2x32x32xbf16, #tpu.memory_space<vmem>>, vector<1x32x32xbf16>
    %109 = vector.shape_cast %108 : vector<1x32x32xbf16> to vector<32x32xbf16>
    %cst_58 = arith.constant dense<0.000000e+00> : vector<32x32xf32>
    %110 = tpu.matmul %107, %109, %cst_58 {dimension_numbers = #tpu.dot_dimension_numbers<[1], [0], [0], [1], [0, 0, 1, 1], [], []>} : vector<32x32xbf16>, vector<32x32xbf16>, vector<32x32xf32> -> vector<32x32xf32>
    %c1_59 = arith.constant 1 : index
    %c0_60 = arith.constant 0 : index
    %c0_61 = arith.constant 0 : index
    %111 = vector.load %arg11[%c1_59, %c0_60, %c0_61] : memref<2x1x32xf32, #tpu.memory_space<vmem>>, vector<1x1x32xf32>
    %112 = vector.shape_cast %111 : vector<1x1x32xf32> to vector<1x32xf32>
    %113 = vector.broadcast %112 : vector<1x32xf32> to vector<32x32xf32>
    %114 = arith.addf %110, %113 : vector<32x32xf32>
    %c1_62 = arith.constant 1 : index
    %c0_63 = arith.constant 0 : index
    %c0_64 = arith.constant 0 : index
    %115 = vector.load %arg9[%c1_62, %c0_63, %c0_64] : memref<2x32x32xbf16, #tpu.memory_space<vmem>>, vector<1x32x32xbf16>
    %116 = vector.shape_cast %115 : vector<1x32x32xbf16> to vector<32x32xbf16>
    %cst_65 = arith.constant dense<0.000000e+00> : vector<32x32xf32>
    %117 = tpu.matmul %107, %116, %cst_65 {dimension_numbers = #tpu.dot_dimension_numbers<[1], [0], [0], [1], [0, 0, 1, 1], [], []>} : vector<32x32xbf16>, vector<32x32xbf16>, vector<32x32xf32> -> vector<32x32xf32>
    %c1_66 = arith.constant 1 : index
    %c0_67 = arith.constant 0 : index
    %c0_68 = arith.constant 0 : index
    %118 = vector.load %arg12[%c1_66, %c0_67, %c0_68] : memref<2x1x32xf32, #tpu.memory_space<vmem>>, vector<1x1x32xf32>
    %119 = vector.shape_cast %118 : vector<1x1x32xf32> to vector<1x32xf32>
    %120 = vector.broadcast %119 : vector<1x32xf32> to vector<32x32xf32>
    %121 = arith.addf %117, %120 : vector<32x32xf32>
    %c1_69 = arith.constant 1 : index
    %c0_70 = arith.constant 0 : index
    %c0_71 = arith.constant 0 : index
    %122 = vector.load %arg10[%c1_69, %c0_70, %c0_71] : memref<2x32x32xbf16, #tpu.memory_space<vmem>>, vector<1x32x32xbf16>
    %123 = vector.shape_cast %122 : vector<1x32x32xbf16> to vector<32x32xbf16>
    %cst_72 = arith.constant dense<0.000000e+00> : vector<32x32xf32>
    %124 = tpu.matmul %107, %123, %cst_72 {dimension_numbers = #tpu.dot_dimension_numbers<[1], [0], [0], [1], [0, 0, 1, 1], [], []>} : vector<32x32xbf16>, vector<32x32xbf16>, vector<32x32xf32> -> vector<32x32xf32>
    %c1_73 = arith.constant 1 : index
    %c0_74 = arith.constant 0 : index
    %c0_75 = arith.constant 0 : index
    %125 = vector.load %arg13[%c1_73, %c0_74, %c0_75] : memref<2x1x32xf32, #tpu.memory_space<vmem>>, vector<1x1x32xf32>
    %126 = vector.shape_cast %125 : vector<1x1x32xf32> to vector<1x32xf32>
    %127 = vector.broadcast %126 : vector<1x32xf32> to vector<32x32xf32>
    %128 = arith.addf %124, %127 : vector<32x32xf32>
    %129 = vector.shape_cast %114 : vector<32x32xf32> to vector<4x8x32xf32>
    %130 = vector.shape_cast %121 : vector<32x32xf32> to vector<4x8x32xf32>
    %131 = vector.shape_cast %128 : vector<32x32xf32> to vector<4x8x32xf32>
    %132 = vector.shape_cast %130 : vector<4x8x32xf32> to vector<4x1x8x32xf32>
    %133 = vector.shape_cast %132 : vector<4x1x8x32xf32> to vector<4x1x8x32xf32>
    %134 = vector.broadcast %133 : vector<4x1x8x32xf32> to vector<4x8x8x32xf32>
    %135 = vector.shape_cast %134 : vector<4x8x8x32xf32> to vector<4x64x32xf32>
    %136 = vector.shape_cast %131 : vector<4x8x32xf32> to vector<4x1x8x32xf32>
    %137 = vector.shape_cast %136 : vector<4x1x8x32xf32> to vector<4x1x8x32xf32>
    %138 = vector.broadcast %137 : vector<4x1x8x32xf32> to vector<4x8x8x32xf32>
    %139 = vector.shape_cast %138 : vector<4x8x8x32xf32> to vector<4x64x32xf32>
    %140 = vector.shape_cast %12 : vector<64x32xf32> to vector<1x64x32xf32>
    %141 = vector.broadcast %140 : vector<1x64x32xf32> to vector<4x64x32xf32>
    %142 = arith.mulf %135, %141 : vector<4x64x32xf32>
    %143 = arith.truncf %142 : vector<4x64x32xf32> to vector<4x64x32xbf16>
    %144 = vector.shape_cast %12 : vector<64x32xf32> to vector<1x64x32xf32>
    %145 = vector.broadcast %144 : vector<1x64x32xf32> to vector<4x64x32xf32>
    %146 = arith.mulf %139, %145 : vector<4x64x32xf32>
    %147 = arith.truncf %146 : vector<4x64x32xf32> to vector<4x64x32xbf16>
    %148 = arith.truncf %129 : vector<4x8x32xf32> to vector<4x8x32xbf16>
    "tpu.trace_start"() <{level = 10 : i32, message = "bqe,bfe->bqf"}> : () -> ()
    %cst_76 = arith.constant dense<0.000000e+00> : vector<4x8x64xf32>
    %149 = tpu.matmul %148, %143, %cst_76 {dimension_numbers = #tpu.dot_dimension_numbers<[2], [2], [1], [1], [0, 0, 0, 1, 1, 1], [0], [0]>} : vector<4x8x32xbf16>, vector<4x64x32xbf16>, vector<4x8x64xf32> -> vector<4x8x64xf32>
    "tpu.trace_stop"() : () -> ()
    %150 = vector.broadcast %11 : vector<4x1x64xf32> to vector<4x8x64xf32>
    %151 = arith.addf %149, %150 : vector<4x8x64xf32>
    %cst_77 = arith.constant dense<0xFF800000> : vector<4x8xf32>
    %152 = vector.multi_reduction <maximumf>, %151, %cst_77 [2] : vector<4x8x64xf32> to vector<4x8xf32>
    %153 = vector.shape_cast %152 : vector<4x8xf32> to vector<4x8x1xf32>
    %154 = vector.broadcast %153 : vector<4x8x1xf32> to vector<4x8x64xf32>
    %155 = arith.subf %151, %154 : vector<4x8x64xf32>
    %156 = math.exp %155 : vector<4x8x64xf32>
    %157 = arith.truncf %156 : vector<4x8x64xf32> to vector<4x8x64xbf16>
    "tpu.trace_start"() <{level = 10 : i32, message = "bqf,bfe->bqe"}> : () -> ()
    %cst_78 = arith.constant dense<0.000000e+00> : vector<4x8x32xf32>
    %158 = tpu.matmul %157, %147, %cst_78 {dimension_numbers = #tpu.dot_dimension_numbers<[2], [1], [1], [2], [0, 0, 0, 1, 1, 2], [0], [0]>} : vector<4x8x64xbf16>, vector<4x64x32xbf16>, vector<4x8x32xf32> -> vector<4x8x32xf32>
    "tpu.trace_stop"() : () -> ()
    %159 = vector.shape_cast %156 : vector<4x8x64xf32> to vector<32x64xf32>
    %160 = arith.truncf %159 : vector<32x64xf32> to vector<32x64xbf16>
    %cst_79 = arith.constant dense<0.000000e+00> : vector<32x8xf32>
    %161 = tpu.matmul %160, %13, %cst_79 {dimension_numbers = #tpu.dot_dimension_numbers<[1], [0], [0], [1], [0, 0, 1, 1], [], []>} : vector<32x64xbf16>, vector<64x8xbf16>, vector<32x8xf32> -> vector<32x8xf32>
    %cst_80 = arith.constant dense<0.000000e+00> : vector<32x32xf32>
    %162 = tpu.matmul %161, %14, %cst_80 {dimension_numbers = #tpu.dot_dimension_numbers<[1], [0], [0], [1], [0, 0, 1, 1], [], []>} : vector<32x8xf32>, vector<8x32xf32>, vector<32x32xf32> -> vector<32x32xf32>
    %163 = vector.shape_cast %158 : vector<4x8x32xf32> to vector<32x32xf32>
    %164 = tpu.reciprocal %162 {approx = true} : vector<32x32xf32> -> vector<32x32xf32>
    %165 = arith.mulf %163, %164 : vector<32x32xf32>
    %166 = arith.truncf %165 : vector<32x32xf32> to vector<32x32xbf16>
    %c1_81 = arith.constant 1 : index
    %c0_82 = arith.constant 0 : index
    %c0_83 = arith.constant 0 : index
    %167 = vector.load %arg14[%c1_81, %c0_82, %c0_83] : memref<2x32x32xbf16, #tpu.memory_space<vmem>>, vector<1x32x32xbf16>
    %168 = vector.shape_cast %167 : vector<1x32x32xbf16> to vector<32x32xbf16>
    %cst_84 = arith.constant dense<0.000000e+00> : vector<32x32xf32>
    %169 = tpu.matmul %166, %168, %cst_84 {dimension_numbers = #tpu.dot_dimension_numbers<[1], [0], [0], [1], [0, 0, 1, 1], [], []>} : vector<32x32xbf16>, vector<32x32xbf16>, vector<32x32xf32> -> vector<32x32xf32>
    %c1_85 = arith.constant 1 : index
    %c0_86 = arith.constant 0 : index
    %c0_87 = arith.constant 0 : index
    %170 = vector.load %arg15[%c1_85, %c0_86, %c0_87] : memref<2x1x32xf32, #tpu.memory_space<vmem>>, vector<1x1x32xf32>
    %171 = vector.shape_cast %170 : vector<1x1x32xf32> to vector<1x32xf32>
    %172 = vector.broadcast %171 : vector<1x32xf32> to vector<32x32xf32>
    %173 = arith.addf %169, %172 : vector<32x32xf32>
    %174 = arith.addf %173, %106 : vector<32x32xf32>
    %cst_88 = arith.constant dense<0.000000e+00> : vector<32xf32>
    %175 = vector.multi_reduction <add>, %174, %cst_88 [1] : vector<32x32xf32> to vector<32xf32>
    %176 = vector.shape_cast %175 : vector<32xf32> to vector<32x1xf32>
    %cst_89 = arith.constant 3.200000e+01 : f32
    %177 = vector.broadcast %cst_89 : f32 to vector<32x1xf32>
    %178 = arith.divf %176, %177 : vector<32x1xf32>
    %179 = vector.broadcast %178 : vector<32x1xf32> to vector<32x32xf32>
    %180 = arith.subf %174, %179 : vector<32x32xf32>
    %181 = arith.mulf %180, %180 : vector<32x32xf32>
    %cst_90 = arith.constant dense<0.000000e+00> : vector<32xf32>
    %182 = vector.multi_reduction <add>, %181, %cst_90 [1] : vector<32x32xf32> to vector<32xf32>
    %183 = vector.shape_cast %182 : vector<32xf32> to vector<32x1xf32>
    %cst_91 = arith.constant 3.200000e+01 : f32
    %184 = vector.broadcast %cst_91 : f32 to vector<32x1xf32>
    %185 = arith.divf %183, %184 : vector<32x1xf32>
    %186 = vector.broadcast %178 : vector<32x1xf32> to vector<32x32xf32>
    %187 = arith.subf %174, %186 : vector<32x32xf32>
    %cst_92 = arith.constant 9.99999974E-6 : f32
    %188 = vector.broadcast %cst_92 : f32 to vector<32x1xf32>
    %189 = arith.addf %185, %188 : vector<32x1xf32>
    %190 = math.rsqrt %189 : vector<32x1xf32>
    %191 = vector.broadcast %190 : vector<32x1xf32> to vector<32x32xf32>
    %192 = arith.mulf %187, %191 : vector<32x32xf32>
    %193 = vector.broadcast %15 : vector<1x32xf32> to vector<32x32xf32>
    %194 = arith.mulf %192, %193 : vector<32x32xf32>
    %195 = vector.broadcast %16 : vector<1x32xf32> to vector<32x32xf32>
    %196 = arith.addf %194, %195 : vector<32x32xf32>
    %197 = vector.shape_cast %196 : vector<32x32xf32> to vector<4x8x32xf32>
    %cst_93 = arith.constant dense<0.000000e+00> : vector<4x32xf32>
    %198 = vector.multi_reduction <add>, %197, %cst_93 [1] : vector<4x8x32xf32> to vector<4x32xf32>
    %cst_94 = arith.constant 8.000000e+00 : f32
    %199 = vector.broadcast %cst_94 : f32 to vector<4x32xf32>
    %200 = arith.divf %198, %199 : vector<4x32xf32>
    %c0_95 = arith.constant 0 : index
    %c0_96 = arith.constant 0 : index
    %201 = vector.load %arg18[%c0_95, %c0_96] : memref<1x32xbf16, #tpu.memory_space<vmem>>, vector<1x32xbf16>
    %202 = arith.truncf %200 : vector<4x32xf32> to vector<4x32xbf16>
    %cst_97 = arith.constant dense<0.000000e+00> : vector<1x4xf32>
    %203 = tpu.matmul %201, %202, %cst_97 {dimension_numbers = #tpu.dot_dimension_numbers<[1], [1], [0], [0], [0, 0, 1, 0], [], []>} : vector<1x32xbf16>, vector<4x32xbf16>, vector<1x4xf32> -> vector<1x4xf32>
    %c0_98 = arith.constant 0 : index
    %c0_99 = arith.constant 0 : index
    %204 = vector.load %arg19[%c0_98, %c0_99] : memref<1x1xf32, #tpu.memory_space<vmem>>, vector<1x1xf32>
    %205 = vector.broadcast %204 : vector<1x1xf32> to vector<1x4xf32>
    %206 = arith.addf %203, %205 : vector<1x4xf32>
    %c0_100 = arith.constant 0 : index
    %c0_101 = arith.constant 0 : index
    %c0_102 = arith.constant 0 : index
    %207 = vector.load %arg20[%c0_100, %c0_101, %c0_102] : memref<1x1x4xf32, #tpu.memory_space<vmem>>, vector<1x1x4xf32>
    %208 = vector.shape_cast %207 : vector<1x1x4xf32> to vector<1x4xf32>
    %209 = vector.shape_cast %206 : vector<1x4xf32> to vector<1x1x4xf32>
    tpu.vector_store %arg20[%c0_100, %c0_101, %c0_102], %209 {strides = array<i32>} : memref<1x1x4xf32, #tpu.memory_space<vmem>>, vector<1x1x4xf32>,
    return
  }
  func.func @transform_0(%arg0: i32) -> (i32, i32) {
    %c0_i32 = arith.constant 0 : i32
    %c0_i32_0 = arith.constant 0 : i32
    return %arg0, %c0_i32 : i32, i32
  }
  func.func @transform_1(%arg0: i32) -> (i32, i32, i32) {
    %c0_i32 = arith.constant 0 : i32
    %c0_i32_0 = arith.constant 0 : i32
    %c0_i32_1 = arith.constant 0 : i32
    return %arg0, %c0_i32, %c0_i32_0 : i32, i32, i32
  }
  func.func @transform_2(%arg0: i32) -> (i32, i32) {
    %c0_i32 = arith.constant 0 : i32
    %c0_i32_0 = arith.constant 0 : i32
    %c0_i32_1 = arith.constant 0 : i32
    return %c0_i32, %c0_i32_0 : i32, i32
  }
  func.func @transform_3(%arg0: i32) -> (i32, i32) {
    %c0_i32 = arith.constant 0 : i32
    %c0_i32_0 = arith.constant 0 : i32
    %c0_i32_1 = arith.constant 0 : i32
    return %c0_i32, %c0_i32_0 : i32, i32
  }
  func.func @transform_4(%arg0: i32) -> (i32, i32) {
    %c0_i32 = arith.constant 0 : i32
    %c0_i32_0 = arith.constant 0 : i32
    %c0_i32_1 = arith.constant 0 : i32
    return %c0_i32, %c0_i32_0 : i32, i32
  }
  func.func @transform_5(%arg0: i32) -> (i32, i32) {
    %c0_i32 = arith.constant 0 : i32
    %c0_i32_0 = arith.constant 0 : i32
    %c0_i32_1 = arith.constant 0 : i32
    return %c0_i32, %c0_i32_0 : i32, i32
  }
  func.func @transform_6(%arg0: i32) -> (i32, i32) {
    %c0_i32 = arith.constant 0 : i32
    %c0_i32_0 = arith.constant 0 : i32
    %c0_i32_1 = arith.constant 0 : i32
    return %c0_i32, %c0_i32_0 : i32, i32
  }
  func.func @transform_7(%arg0: i32) -> (i32, i32, i32) {
    %c0_i32 = arith.constant 0 : i32
    %c0_i32_0 = arith.constant 0 : i32
    %c0_i32_1 = arith.constant 0 : i32
    %c0_i32_2 = arith.constant 0 : i32
    return %c0_i32, %c0_i32_0, %c0_i32_1 : i32, i32, i32
  }
  func.func @transform_8(%arg0: i32) -> (i32, i32, i32) {
    %c0_i32 = arith.constant 0 : i32
    %c0_i32_0 = arith.constant 0 : i32
    %c0_i32_1 = arith.constant 0 : i32
    %c0_i32_2 = arith.constant 0 : i32
    return %c0_i32, %c0_i32_0, %c0_i32_1 : i32, i32, i32
  }
  func.func @transform_9(%arg0: i32) -> (i32, i32, i32) {
    %c0_i32 = arith.constant 0 : i32
    %c0_i32_0 = arith.constant 0 : i32
    %c0_i32_1 = arith.constant 0 : i32
    %c0_i32_2 = arith.constant 0 : i32
    return %c0_i32, %c0_i32_0, %c0_i32_1 : i32, i32, i32
  }
  func.func @transform_10(%arg0: i32) -> (i32, i32, i32) {
    %c0_i32 = arith.constant 0 : i32
    %c0_i32_0 = arith.constant 0 : i32
    %c0_i32_1 = arith.constant 0 : i32
    %c0_i32_2 = arith.constant 0 : i32
    return %c0_i32, %c0_i32_0, %c0_i32_1 : i32, i32, i32
  }
  func.func @transform_11(%arg0: i32) -> (i32, i32, i32) {
    %c0_i32 = arith.constant 0 : i32
    %c0_i32_0 = arith.constant 0 : i32
    %c0_i32_1 = arith.constant 0 : i32
    %c0_i32_2 = arith.constant 0 : i32
    return %c0_i32, %c0_i32_0, %c0_i32_1 : i32, i32, i32
  }
  func.func @transform_12(%arg0: i32) -> (i32, i32, i32) {
    %c0_i32 = arith.constant 0 : i32
    %c0_i32_0 = arith.constant 0 : i32
    %c0_i32_1 = arith.constant 0 : i32
    %c0_i32_2 = arith.constant 0 : i32
    return %c0_i32, %c0_i32_0, %c0_i32_1 : i32, i32, i32
  }
  func.func @transform_13(%arg0: i32) -> (i32, i32, i32) {
    %c0_i32 = arith.constant 0 : i32
    %c0_i32_0 = arith.constant 0 : i32
    %c0_i32_1 = arith.constant 0 : i32
    %c0_i32_2 = arith.constant 0 : i32
    return %c0_i32, %c0_i32_0, %c0_i32_1 : i32, i32, i32
  }
  func.func @transform_14(%arg0: i32) -> (i32, i32, i32) {
    %c0_i32 = arith.constant 0 : i32
    %c0_i32_0 = arith.constant 0 : i32
    %c0_i32_1 = arith.constant 0 : i32
    %c0_i32_2 = arith.constant 0 : i32
    return %c0_i32, %c0_i32_0, %c0_i32_1 : i32, i32, i32
  }
  func.func @transform_15(%arg0: i32) -> (i32, i32) {
    %c0_i32 = arith.constant 0 : i32
    %c0_i32_0 = arith.constant 0 : i32
    %c0_i32_1 = arith.constant 0 : i32
    return %c0_i32, %c0_i32_0 : i32, i32
  }
  func.func @transform_16(%arg0: i32) -> (i32, i32) {
    %c0_i32 = arith.constant 0 : i32
    %c0_i32_0 = arith.constant 0 : i32
    %c0_i32_1 = arith.constant 0 : i32
    return %c0_i32, %c0_i32_0 : i32, i32
  }
  func.func @transform_17(%arg0: i32) -> (i32, i32) {
    %c0_i32 = arith.constant 0 : i32
    %c0_i32_0 = arith.constant 0 : i32
    %c0_i32_1 = arith.constant 0 : i32
    return %c0_i32, %c0_i32_0 : i32, i32
  }
  func.func @transform_18(%arg0: i32) -> (i32, i32) {
    %c0_i32 = arith.constant 0 : i32
    %c0_i32_0 = arith.constant 0 : i32
    %c0_i32_1 = arith.constant 0 : i32
    return %c0_i32, %c0_i32_0 : i32, i32
  }
  func.func @transform_19(%arg0: i32) -> (i32, i32, i32) {
    %c0_i32 = arith.constant 0 : i32
    %c0_i32_0 = arith.constant 0 : i32
    %c0_i32_1 = arith.constant 0 : i32
    return %arg0, %c0_i32, %c0_i32_0 : i32, i32, i32
  }
}

</mosaic_0001>

<llo_original>
// kernel: tpu_custom_call.1
$region0: #{tpu_custom_call.1}
  #allocation0 [shape = 'u32[]', space=smem, size = 0x4, offset = 0x4, fixed_abs, tag = 'smem constant byte address 0x4 - core index']
  #allocation1 [shape = 'u32[72,128]{1,0:T(1,128)}', space=vmem, size = 0x9000, scoped, tag = 'internal scratch']
  #allocation2 [shape = 'f32[1,1]{1,0:T(1,128)S(1)}', space=vmem, size = 0x200, scoped, tag = 'scoped memory for tpu_custom_call.1']
  %s0 = inlined_call_operand.vmem [shape: s32[32,1], index: 0, kind: input, shape index: {}]
  %s1 = inlined_call_operand.vmem [shape: f32[4,1,64], index: 1, kind: input, shape index: {}]
  %s2 = inlined_call_operand.vmem [shape: bf16[50,32], index: 2, kind: input, shape index: {}]
  %s3 = inlined_call_operand.vmem [shape: f32[32,32], index: 3, kind: input, shape index: {}]
  %s4 = inlined_call_operand.vmem [shape: f32[64,32], index: 4, kind: input, shape index: {}]
  %s5 = inlined_call_operand.vmem [shape: bf16[64,8], index: 5, kind: input, shape index: {}]
  %s6 = inlined_call_operand.vmem [shape: f32[8,32], index: 6, kind: input, shape index: {}]
  %s7 = inlined_call_operand.vmem [shape: bf16[2,32,32], index: 7, kind: input, shape index: {}]
  %s8 = inlined_call_operand.vmem [shape: bf16[2,32,32], index: 8, kind: input, shape index: {}]
  %s9 = inlined_call_operand.vmem [shape: bf16[2,32,32], index: 9, kind: input, shape index: {}]
  %s10 = inlined_call_operand.vmem [shape: f32[2,1,32], index: 10, kind: input, shape index: {}]
  %s11 = inlined_call_operand.vmem [shape: f32[2,1,32], index: 11, kind: input, shape index: {}]
  %s12 = inlined_call_operand.vmem [shape: f32[2,1,32], index: 12, kind: input, shape index: {}]
  %s13 = inlined_call_operand.vmem [shape: bf16[2,32,32], index: 13, kind: input, shape index: {}]
  %s14 = inlined_call_operand.vmem [shape: f32[2,1,32], index: 14, kind: input, shape index: {}]
  %s15 = inlined_call_operand.vmem [shape: f32[1,32], index: 15, kind: input, shape index: {}]
  %s16 = inlined_call_operand.vmem [shape: f32[1,32], index: 16, kind: input, shape index: {}]
  %s17 = inlined_call_operand.vmem [shape: bf16[1,32], index: 17, kind: input, shape index: {}]
  %s18 = inlined_call_operand.<no memory space> [shape: f32[1,1], index: 18, kind: input, shape index: {}]
  %s19 = inlined_call_operand.hbm [shape: f32[1,1,4], index: 19, kind: output, shape index: {}]
  %s20 = sld [smem:[#allocation0]]
  $region86: #{tpu_custom_call.1} parent=0
    _
  %s22 = ssub.s32 1, %s20
  %s23 = scalar_select 0, %s22, %s20
  %v24 = vstv %s18
  %25 = vst [vmem:[#allocation2] sm:$0x1] %v24
  $region1: #{tpu_custom_call.1} parent=0
    #allocation3 [shape = 'u8[512]{0}', space=vmem, size = 0x400, scoped, tag = 'output window, operand 0, single buffered']
    #allocation4 [shape = 's32[1]{0}', space=sflag, size = 0x4, scoped, tag = 'scoped memory for tpu_custom_call.1']
    %26 = vsyncpa [#allocation4], 0
    // Predicated region
    $region2: #{tpu_custom_call.1} parent=1 // pred_check
      _
    $region3: #{tpu_custom_call.1} parent=1 // pred_check_branch
      %28 = sbr.rel (0) target = $region5
    $region4: #{tpu_custom_call.1} parent=1 // pred_region
      _
    $region5: #{tpu_custom_call.1} parent=1 // pred_fallthru
      _
    // Predicated region
    $region6: #{tpu_custom_call.1} parent=1 // pred_check
      _
    $region7: #{tpu_custom_call.1} parent=1 // pred_check_branch
      %30 = sbr.rel (0) target = $region9
    $region8: #{tpu_custom_call.1} parent=1 // pred_region
      _
    $region9: #{tpu_custom_call.1} parent=1 // pred_fallthru
      _
    // Predicated region
    $region10: #{tpu_custom_call.1} parent=1 // pred_check
      _
    $region11: #{tpu_custom_call.1} parent=1 // pred_check_branch
      %32 = sbr.rel (0) target = $region13
    $region12: #{tpu_custom_call.1} parent=1 // pred_region
      _
    $region13: #{tpu_custom_call.1} parent=1 // pred_fallthru
      _
    // Predicated region
    $region14: #{tpu_custom_call.1} parent=1 // pred_check
      _
    $region15: #{tpu_custom_call.1} parent=1 // pred_check_branch
      %34 = sbr.rel (0) target = $region17
    $region16: #{tpu_custom_call.1} parent=1 // pred_region
      _
    $region17: #{tpu_custom_call.1} parent=1 // pred_fallthru
      _
    // Predicated region
    $region18: #{tpu_custom_call.1} parent=1 // pred_check
      _
    $region19: #{tpu_custom_call.1} parent=1 // pred_check_branch
      %36 = sbr.rel (0) target = $region21
    $region20: #{tpu_custom_call.1} parent=1 // pred_region
      _
    $region21: #{tpu_custom_call.1} parent=1 // pred_fallthru
      _
    // Predicated region
    $region22: #{tpu_custom_call.1} parent=1 // pred_check
      _
    $region23: #{tpu_custom_call.1} parent=1 // pred_check_branch
      %38 = sbr.rel (0) target = $region25
    $region24: #{tpu_custom_call.1} parent=1 // pred_region
      _
    $region25: #{tpu_custom_call.1} parent=1 // pred_fallthru
      _
    // Predicated region
    $region26: #{tpu_custom_call.1} parent=1 // pred_check
      _
    $region27: #{tpu_custom_call.1} parent=1 // pred_check_branch
      %40 = sbr.rel (0) target = $region29
    $region28: #{tpu_custom_call.1} parent=1 // pred_region
      _
    $region29: #{tpu_custom_call.1} parent=1 // pred_fallthru
      _
    // Predicated region
    $region30: #{tpu_custom_call.1} parent=1 // pred_check
      _
    $region31: #{tpu_custom_call.1} parent=1 // pred_check_branch
      %42 = sbr.rel (0) target = $region33
    $region32: #{tpu_custom_call.1} parent=1 // pred_region
      _
    $region33: #{tpu_custom_call.1} parent=1 // pred_fallthru
      _
    // Predicated region
    $region34: #{tpu_custom_call.1} parent=1 // pred_check
      _
    $region35: #{tpu_custom_call.1} parent=1 // pred_check_branch
      %44 = sbr.rel (0) target = $region37
    $region36: #{tpu_custom_call.1} parent=1 // pred_region
      _
    $region37: #{tpu_custom_call.1} parent=1 // pred_fallthru
      _
    // Predicated region
    $region38: #{tpu_custom_call.1} parent=1 // pred_check
      _
    $region39: #{tpu_custom_call.1} parent=1 // pred_check_branch
      %46 = sbr.rel (0) target = $region41
    $region40: #{tpu_custom_call.1} parent=1 // pred_region
      _
    $region41: #{tpu_custom_call.1} parent=1 // pred_fallthru
      _
    // Predicated region
    $region42: #{tpu_custom_call.1} parent=1 // pred_check
      _
    $region43: #{tpu_custom_call.1} parent=1 // pred_check_branch
      %48 = sbr.rel (0) target = $region45
    $region44: #{tpu_custom_call.1} parent=1 // pred_region
      _
    $region45: #{tpu_custom_call.1} parent=1 // pred_fallthru
      _
    // Predicated region
    $region46: #{tpu_custom_call.1} parent=1 // pred_check
      _
    $region47: #{tpu_custom_call.1} parent=1 // pred_check_branch
      %50 = sbr.rel (0) target = $region49
    $region48: #{tpu_custom_call.1} parent=1 // pred_region
      _
    $region49: #{tpu_custom_call.1} parent=1 // pred_fallthru
      _
    // Predicated region
    $region50: #{tpu_custom_call.1} parent=1 // pred_check
      _
    $region51: #{tpu_custom_call.1} parent=1 // pred_check_branch
      %52 = sbr.rel (0) target = $region53
    $region52: #{tpu_custom_call.1} parent=1 // pred_region
      _
    $region53: #{tpu_custom_call.1} parent=1 // pred_fallthru
      _
    // Predicated region
    $region54: #{tpu_custom_call.1} parent=1 // pred_check
      _
    $region55: #{tpu_custom_call.1} parent=1 // pred_check_branch
      %54 = sbr.rel (0) target = $region57
    $region56: #{tpu_custom_call.1} parent=1 // pred_region
      _
    $region57: #{tpu_custom_call.1} parent=1 // pred_fallthru
      _
    // Predicated region
    $region58: #{tpu_custom_call.1} parent=1 // pred_check
      _
    $region59: #{tpu_custom_call.1} parent=1 // pred_check_branch
      %56 = sbr.rel (0) target = $region61
    $region60: #{tpu_custom_call.1} parent=1 // pred_region
      _
    $region61: #{tpu_custom_call.1} parent=1 // pred_fallthru
      _
    // Predicated region
    $region62: #{tpu_custom_call.1} parent=1 // pred_check
      _
    $region63: #{tpu_custom_call.1} parent=1 // pred_check_branch
      %58 = sbr.rel (0) target = $region65
    $region64: #{tpu_custom_call.1} parent=1 // pred_region
      _
    $region65: #{tpu_custom_call.1} parent=1 // pred_fallthru
      _
    // Predicated region
    $region66: #{tpu_custom_call.1} parent=1 // pred_check
      _
    $region67: #{tpu_custom_call.1} parent=1 // pred_check_branch
      %60 = sbr.rel (0) target = $region69
    $region68: #{tpu_custom_call.1} parent=1 // pred_region
      _
    $region69: #{tpu_custom_call.1} parent=1 // pred_fallthru
      _
    // Predicated region
    $region70: #{tpu_custom_call.1} parent=1 // pred_check
      _
    $region71: #{tpu_custom_call.1} parent=1 // pred_check_branch
      %62 = sbr.rel (0) target = $region73
    $region72: #{tpu_custom_call.1} parent=1 // pred_region
      _
    $region73: #{tpu_custom_call.1} parent=1 // pred_fallthru
      _
    // Predicated region
    $region74: #{tpu_custom_call.1} parent=1 // pred_check
      _
    $region75: #{tpu_custom_call.1} parent=1 // pred_check_branch
      %64 = sbr.rel (0) target = $region77
    $region76: #{tpu_custom_call.1} parent=1 // pred_region
      _
    $region77: #{tpu_custom_call.1} parent=1 // pred_fallthru
      _
    %v66 = vld [vmem:[%s0] sm:$0xff]
    %v67 = vld [vmem:[%s0 + $0x8] sm:$0xff]
    %v68 = vld [vmem:[%s0 + $0x10] sm:$0xff]
    %v69 = vld [vmem:[%s0 + $0x18] sm:$0xff]
    %v70 = vlaneseq
    %v71 = vand.u32 %v70, 127
    %72 = vset.pattern.permute.xlu0 0
    %73 = vperm.xlu0 %72, %v66
    %v74 = vpop.permute.xlu0 %73
    %75 = vset.pattern.permute.xlu0 0
    %76 = vperm.xlu0 %75, %v67
    %v77 = vpop.permute.xlu0 %76
    %78 = vset.pattern.permute.xlu0 0
    %79 = vperm.xlu0 %78, %v68
    %v80 = vpop.permute.xlu0 %79
    %81 = vset.pattern.permute.xlu0 0
    %82 = vperm.xlu0 %81, %v69
    %v83 = vpop.permute.xlu0 %82
    %vm84 = vcmp.eq.s32.totalorder %v71, %v74
    %vm85 = vcmp.eq.s32.totalorder %v71, %v77
    %vm86 = vcmp.eq.s32.totalorder %v71, %v80
    %vm87 = vcmp.eq.s32.totalorder %v71, %v83
    %v88 = vsel %vm84, 1, 0
    %v89 = vsel %vm85, 1, 0
    %v90 = vsel %vm86, 1, 0
    %v91 = vsel %vm87, 1, 0
    %v92 = vcvt.s32.f32 %v88
    %v93 = vcvt.s32.f32 %v89
    %v94 = vcvt.s32.f32 %v90
    %v95 = vcvt.s32.f32 %v91
    %v96 = vpack.c.bf16 %v93, %v92
    %v97 = vpack.c.bf16 %v95, %v94
    %v98 = vld [vmem:[%s2] sm:$0xf]
    %v99 = vld [vmem:[%s2 + $0x4] sm:$0xf]
    %v100 = vld [vmem:[%s2 + $0x8] sm:$0xf]
    %v101 = vld [vmem:[%s2 + $0xc] sm:$0xf]
    %v102 = vld [vmem:[%s2 + $0x10] sm:$0xf]
    %v103 = vld [vmem:[%s2 + $0x14] sm:$0xf]
    %v104 = vld [vmem:[%s2 + $0x18] sm:$0x1]
    %v105 = vld [vmem:[%s3] sm:$0xff]
    %v106 = vld [vmem:[%s3 + $0x8] sm:$0xff]
    %v107 = vld [vmem:[%s3 + $0x10] sm:$0xff]
    %v108 = vld [vmem:[%s3 + $0x18] sm:$0xff]
    %v116 = vunpack.c.l.b16 %v98
    %v117 = vunpack.c.l.b16 %v99
    %v118 = vunpack.c.l.b16 %v100
    %v119 = vunpack.c.l.b16 %v101
    %v120 = vunpack.c.l.b16 %v102
    %v121 = vunpack.c.l.b16 %v103
    %v122 = vunpack.c.l.b16 %v104
    %v123 = vpack.c.b16 %v117, %v116
    %v124 = vpack.c.b16 %v119, %v118
    %v125 = vpack.c.b16 %v121, %v120
    %v126 = vpack.c.b16 %v122, %v122
    %vm130 = vcmask 408576
    %v132 = vsel %vm130, %v96, 0
    %v135 = vsel %vm130, %v97, 0
    %vm137 = vcmask 1040384
    %v139 = vsel %vm137, %v126, 0
    %141 = vmatpush.bf16.msra.mxu0 0
    %142 = vmatpush.bf16.msra.mxu0 0
    %143 = vmatpush.bf16.msra.mxu0 0
    %144 = vmatpush.bf16.msra.mxu0 0
    %145 = vmatpush.bf16.msra.mxu0 %v139
    %146 = vmatpush.bf16.msra.mxu0 %v125
    %147 = vmatpush.bf16.msra.mxu0 %v124
    %148 = vmatpush.bf16.msra.mxu0 %v123
    %149 = vmatmul.bf16.gmra.mxu0 %v132
    %v150 = vpop.f32.mrf.mxu0
    %v151 = vadd.f32 %v105, %v150
    %v152 = vpop.f32.mrf.mxu0
    %v153 = vadd.f32 %v106, %v152
    %154 = vmatmul.bf16.gmra.mxu0 %v135
    %v155 = vpop.f32.mrf.mxu0
    %v156 = vadd.f32 %v107, %v155
    %v157 = vpop.f32.mrf.mxu0
    %v158 = vadd.f32 %v108, %v157
    %159 = vdwg.mxu0
    %v160 = vld [vmem:[%s1] sm:$0x1]
    %v161 = vld [vmem:[%s1 + $0x1] sm:$0x1]
    %v162 = vld [vmem:[%s1 + $0x2] sm:$0x1]
    %v163 = vld [vmem:[%s1 + $0x3] sm:$0x1]
    %v164 = vld [vmem:[%s4] sm:$0xff]
    %v165 = vld [vmem:[%s4 + $0x8] sm:$0xff]
    %v166 = vld [vmem:[%s4 + $0x10] sm:$0xff]
    %v167 = vld [vmem:[%s4 + $0x18] sm:$0xff]
    %v168 = vld [vmem:[%s4 + $0x20] sm:$0xff]
    %v169 = vld [vmem:[%s4 + $0x28] sm:$0xff]
    %v170 = vld [vmem:[%s4 + $0x30] sm:$0xff]
    %v171 = vld [vmem:[%s4 + $0x38] sm:$0xff]
    %v172 = vld [vmem:[%s5] sm:$0xf]
    %v173 = vld [vmem:[%s5 + $0x4] sm:$0xf]
    %v174 = vld [vmem:[%s5 + $0x8] sm:$0xf]
    %v175 = vld [vmem:[%s5 + $0xc] sm:$0xf]
    %v176 = vld [vmem:[%s5 + $0x10] sm:$0xf]
    %v177 = vld [vmem:[%s5 + $0x14] sm:$0xf]
    %v178 = vld [vmem:[%s5 + $0x18] sm:$0xf]
    %v179 = vld [vmem:[%s5 + $0x1c] sm:$0xf]
    %v180 = vld [vmem:[%s6] sm:$0xff]
    %v181 = vld [vmem:[%s15] sm:$0x1]
    %v182 = vld [vmem:[%s16] sm:$0x1]
    %v183 = vpack.c.bf16 %v153, %v151
    %v184 = vpack.c.bf16 %v158, %v156
    %v185 = vld [vmem:[%s7] sm:$0xf]
    %v186 = vld [vmem:[%s7 + $0x4] sm:$0xf]
    %v187 = vld [vmem:[%s7 + $0x8] sm:$0xf]
    %v188 = vld [vmem:[%s7 + $0xc] sm:$0xf]
    %v189 = vld [vmem:[%s10] sm:$0x1]
    %v191 = vperm.slane %v189, 0
    %v197 = vunpack.c.l.b16 %v185
    %v198 = vunpack.c.l.b16 %v186
    %v199 = vunpack.c.l.b16 %v187
    %v200 = vunpack.c.l.b16 %v188
    %v201 = vpack.c.b16 %v198, %v197
    %v202 = vpack.c.b16 %v200, %v199
    %vm205 = vcmask 261120
    %v207 = vsel %vm205, %v183, 0
    %v210 = vsel %vm205, %v184, 0
    %212 = vmatpush.bf16.msra.mxu0 0
    %213 = vmatpush.bf16.msra.mxu0 0
    %214 = vmatpush.bf16.msra.mxu0 0
    %215 = vmatpush.bf16.msra.mxu0 0
    %216 = vmatpush.bf16.msra.mxu0 0
    %217 = vmatpush.bf16.msra.mxu0 0
    %218 = vmatpush.bf16.msra.mxu0 %v202
    %219 = vmatpush.bf16.msra.mxu0 %v201
    %220 = vmatmul.bf16.gmra.mxu0 %v207
    %v221 = vpop.f32.mrf.mxu0
    %v222 = vadd.f32 %v191, %v221
    %v223 = vpop.f32.mrf.mxu0
    %v224 = vadd.f32 %v191, %v223
    %225 = vmatmul.bf16.gmra.mxu0 %v210
    %v226 = vpop.f32.mrf.mxu0
    %v227 = vadd.f32 %v191, %v226
    %v228 = vpop.f32.mrf.mxu0
    %v229 = vadd.f32 %v191, %v228
    %230 = vdwg.mxu0
    %v231 = vld [vmem:[%s8] sm:$0xf]
    %v232 = vld [vmem:[%s8 + $0x4] sm:$0xf]
    %v233 = vld [vmem:[%s8 + $0x8] sm:$0xf]
    %v234 = vld [vmem:[%s8 + $0xc] sm:$0xf]
    %v235 = vld [vmem:[%s11] sm:$0x1]
    %v237 = vperm.slane %v235, 0
    %v243 = vunpack.c.l.b16 %v231
    %v244 = vunpack.c.l.b16 %v232
    %v245 = vunpack.c.l.b16 %v233
    %v246 = vunpack.c.l.b16 %v234
    %v247 = vpack.c.b16 %v244, %v243
    %v248 = vpack.c.b16 %v246, %v245
    %251 = vmatpush.bf16.msra.mxu0 0
    %252 = vmatpush.bf16.msra.mxu0 0
    %253 = vmatpush.bf16.msra.mxu0 0
    %254 = vmatpush.bf16.msra.mxu0 0
    %255 = vmatpush.bf16.msra.mxu0 0
    %256 = vmatpush.bf16.msra.mxu0 0
    %257 = vmatpush.bf16.msra.mxu0 %v248
    %258 = vmatpush.bf16.msra.mxu0 %v247
    %259 = vmatmul.bf16.gmra.mxu0 %v207
    %v260 = vpop.f32.mrf.mxu0
    %v261 = vadd.f32 %v237, %v260
    %v262 = vpop.f32.mrf.mxu0
    %v263 = vadd.f32 %v237, %v262
    %264 = vmatmul.bf16.gmra.mxu0 %v210
    %v265 = vpop.f32.mrf.mxu0
    %v266 = vadd.f32 %v237, %v265
    %v267 = vpop.f32.mrf.mxu0
    %v268 = vadd.f32 %v237, %v267
    %269 = vdwg.mxu0
    %v270 = vld [vmem:[%s9] sm:$0xf]
    %v271 = vld [vmem:[%s9 + $0x4] sm:$0xf]
    %v272 = vld [vmem:[%s9 + $0x8] sm:$0xf]
    %v273 = vld [vmem:[%s9 + $0xc] sm:$0xf]
    %v274 = vld [vmem:[%s12] sm:$0x1]
    %v276 = vperm.slane %v274, 0
    %v282 = vunpack.c.l.b16 %v270
    %v283 = vunpack.c.l.b16 %v271
    %v284 = vunpack.c.l.b16 %v272
    %v285 = vunpack.c.l.b16 %v273
    %v286 = vpack.c.b16 %v283, %v282
    %v287 = vpack.c.b16 %v285, %v284
    %290 = vmatpush.bf16.msra.mxu0 0
    %291 = vmatpush.bf16.msra.mxu0 0
    %292 = vmatpush.bf16.msra.mxu0 0
    %293 = vmatpush.bf16.msra.mxu0 0
    %294 = vmatpush.bf16.msra.mxu0 0
    %295 = vmatpush.bf16.msra.mxu0 0
    %296 = vmatpush.bf16.msra.mxu0 %v287
    %297 = vmatpush.bf16.msra.mxu0 %v286
    %298 = vmatmul.bf16.gmra.mxu0 %v207
    %v299 = vpop.f32.mrf.mxu0
    %v300 = vadd.f32 %v276, %v299
    %v301 = vpop.f32.mrf.mxu0
    %v302 = vadd.f32 %v276, %v301
    %303 = vmatmul.bf16.gmra.mxu0 %v210
    %v304 = vpop.f32.mrf.mxu0
    %v305 = vadd.f32 %v276, %v304
    %v306 = vpop.f32.mrf.mxu0
    %v307 = vadd.f32 %v276, %v306
    %308 = vdwg.mxu0
    %v309 = vmul.f32 %v261, %v164
    %v310 = vmul.f32 %v261, %v165
    %v311 = vmul.f32 %v261, %v166
    %v312 = vmul.f32 %v261, %v167
    %v313 = vmul.f32 %v261, %v168
    %v314 = vmul.f32 %v261, %v169
    %v315 = vmul.f32 %v261, %v170
    %v316 = vmul.f32 %v261, %v171
    %v317 = vmul.f32 %v263, %v164
    %v318 = vmul.f32 %v263, %v165
    %v319 = vmul.f32 %v263, %v166
    %v320 = vmul.f32 %v263, %v167
    %v321 = vmul.f32 %v263, %v168
    %v322 = vmul.f32 %v263, %v169
    %v323 = vmul.f32 %v263, %v170
    %v324 = vmul.f32 %v263, %v171
    %v325 = vmul.f32 %v266, %v164
    %v326 = vmul.f32 %v266, %v165
    %v327 = vmul.f32 %v266, %v166
    %v328 = vmul.f32 %v266, %v167
    %v329 = vmul.f32 %v266, %v168
    %v330 = vmul.f32 %v266, %v169
    %v331 = vmul.f32 %v266, %v170
    %v332 = vmul.f32 %v266, %v171
    %v333 = vmul.f32 %v268, %v164
    %v334 = vmul.f32 %v268, %v165
    %v335 = vmul.f32 %v268, %v166
    %v336 = vmul.f32 %v268, %v167
    %v337 = vmul.f32 %v268, %v168
    %v338 = vmul.f32 %v268, %v169
    %v339 = vmul.f32 %v268, %v170
    %v340 = vmul.f32 %v268, %v171
    %v341 = vpack.c.bf16 %v309, %v309
    %v342 = vpack.c.bf16 %v310, %v310
    %v343 = vpack.c.bf16 %v311, %v311
    %v344 = vpack.c.bf16 %v312, %v312
    %v345 = vpack.c.bf16 %v313, %v313
    %v346 = vpack.c.bf16 %v314, %v314
    %v347 = vpack.c.bf16 %v315, %v315
    %v348 = vpack.c.bf16 %v316, %v316
    %v349 = vpack.c.bf16 %v317, %v317
    %v350 = vpack.c.bf16 %v318, %v318
    %v351 = vpack.c.bf16 %v319, %v319
    %v352 = vpack.c.bf16 %v320, %v320
    %v353 = vpack.c.bf16 %v321, %v321
    %v354 = vpack.c.bf16 %v322, %v322
    %v355 = vpack.c.bf16 %v323, %v323
    %v356 = vpack.c.bf16 %v324, %v324
    %v357 = vpack.c.bf16 %v325, %v325
    %v358 = vpack.c.bf16 %v326, %v326
    %v359 = vpack.c.bf16 %v327, %v327
    %v360 = vpack.c.bf16 %v328, %v328
    %v361 = vpack.c.bf16 %v329, %v329
    %v362 = vpack.c.bf16 %v330, %v330
    %v363 = vpack.c.bf16 %v331, %v331
    %v364 = vpack.c.bf16 %v332, %v332
    %v365 = vpack.c.bf16 %v333, %v333
    %v366 = vpack.c.bf16 %v334, %v334
    %v367 = vpack.c.bf16 %v335, %v335
    %v368 = vpack.c.bf16 %v336, %v336
    %v369 = vpack.c.bf16 %v337, %v337
    %v370 = vpack.c.bf16 %v338, %v338
    %v371 = vpack.c.bf16 %v339, %v339
    %v372 = vpack.c.bf16 %v340, %v340
    %v373 = vmul.f32 %v300, %v164
    %v374 = vmul.f32 %v300, %v165
    %v375 = vmul.f32 %v300, %v166
    %v376 = vmul.f32 %v300, %v167
    %v377 = vmul.f32 %v300, %v168
    %v378 = vmul.f32 %v300, %v169
    %v379 = vmul.f32 %v300, %v170
    %v380 = vmul.f32 %v300, %v171
    %v381 = vmul.f32 %v302, %v164
    %v382 = vmul.f32 %v302, %v165
    %v383 = vmul.f32 %v302, %v166
    %v384 = vmul.f32 %v302, %v167
    %v385 = vmul.f32 %v302, %v168
    %v386 = vmul.f32 %v302, %v169
    %v387 = vmul.f32 %v302, %v170
    %v388 = vmul.f32 %v302, %v171
    %v389 = vmul.f32 %v305, %v164
    %v390 = vmul.f32 %v305, %v165
    %v391 = vmul.f32 %v305, %v166
    %v392 = vmul.f32 %v305, %v167
    %v393 = vmul.f32 %v305, %v168
    %v394 = vmul.f32 %v305, %v169
    %v395 = vmul.f32 %v305, %v170
    %v396 = vmul.f32 %v305, %v171
    %v397 = vmul.f32 %v307, %v164
    %v398 = vmul.f32 %v307, %v165
    %v399 = vmul.f32 %v307, %v166
    %v400 = vmul.f32 %v307, %v167
    %v401 = vmul.f32 %v307, %v168
    %v402 = vmul.f32 %v307, %v169
    %v403 = vmul.f32 %v307, %v170
    %v404 = vmul.f32 %v307, %v171
    %v405 = vpack.c.bf16 %v373, %v373
    %v406 = vpack.c.bf16 %v374, %v374
    %v407 = vpack.c.bf16 %v375, %v375
    %v408 = vpack.c.bf16 %v376, %v376
    %v409 = vpack.c.bf16 %v377, %v377
    %v410 = vpack.c.bf16 %v378, %v378
    %v411 = vpack.c.bf16 %v379, %v379
    %v412 = vpack.c.bf16 %v380, %v380
    %v413 = vpack.c.bf16 %v381, %v381
    %v414 = vpack.c.bf16 %v382, %v382
    %v415 = vpack.c.bf16 %v383, %v383
    %v416 = vpack.c.bf16 %v384, %v384
    %v417 = vpack.c.bf16 %v385, %v385
    %v418 = vpack.c.bf16 %v386, %v386
    %v419 = vpack.c.bf16 %v387, %v387
    %v420 = vpack.c.bf16 %v388, %v388
    %v421 = vpack.c.bf16 %v389, %v389
    %v422 = vpack.c.bf16 %v390, %v390
    %v423 = vpack.c.bf16 %v391, %v391
    %v424 = vpack.c.bf16 %v392, %v392
    %v425 = vpack.c.bf16 %v393, %v393
    %v426 = vpack.c.bf16 %v394, %v394
    %v427 = vpack.c.bf16 %v395, %v395
    %v428 = vpack.c.bf16 %v396, %v396
    %v429 = vpack.c.bf16 %v397, %v397
    %v430 = vpack.c.bf16 %v398, %v398
    %v431 = vpack.c.bf16 %v399, %v399
    %v432 = vpack.c.bf16 %v400, %v400
    %v433 = vpack.c.bf16 %v401, %v401
    %v434 = vpack.c.bf16 %v402, %v402
    %v435 = vpack.c.bf16 %v403, %v403
    %v436 = vpack.c.bf16 %v404, %v404
    %v437 = vpack.c.bf16 %v222, %v222
    %v438 = vpack.c.bf16 %v224, %v224
    %v439 = vpack.c.bf16 %v227, %v227
    %v440 = vpack.c.bf16 %v229, %v229
    %v445 = vperm.slane %v160, 0
    %v446 = vperm.slane %v161, 0
    %v447 = vperm.slane %v162, 0
    %v448 = vperm.slane %v163, 0
    %v461 = vunpack.c.l.b16 %v341
    %v462 = vunpack.c.l.b16 %v342
    %v463 = vunpack.c.l.b16 %v343
    %v464 = vunpack.c.l.b16 %v344
    %v465 = vunpack.c.l.b16 %v345
    %v466 = vunpack.c.l.b16 %v346
    %v467 = vunpack.c.l.b16 %v347
    %v468 = vunpack.c.l.b16 %v348
    %v469 = vpack.c.b16 %v462, %v461
    %v470 = vpack.c.b16 %v464, %v463
    %v471 = vpack.c.b16 %v466, %v465
    %v472 = vpack.c.b16 %v468, %v467
    %v474 = vsel %vm205, %v437, 0
    %v477 = vsel %vm205, %v469, 0
    %v480 = vsel %vm205, %v470, 0
    %v483 = vsel %vm205, %v471, 0
    %v486 = vsel %vm205, %v472, 0
    %488 = vmatpush.bf16.xpose.msra.mxu0 0
    %489 = vmatpush.bf16.xpose.msra.mxu0 0
    %490 = vmatpush.bf16.xpose.msra.mxu0 0
    %491 = vmatpush.bf16.xpose.msra.mxu0 0
    %492 = vmatpush.bf16.xpose.msra.mxu0 %v486
    %493 = vmatpush.bf16.xpose.msra.mxu0 %v483
    %494 = vmatpush.bf16.xpose.msra.mxu0 %v480
    %495 = vmatpush.bf16.xpose.msra.mxu0 %v477
    %496 = vmatmul.bf16.gmra.mxu0 %v474
    %v497 = vpop.f32.mrf.mxu0
    %v498 = vadd.f32 %v445, %v497
    %v499 = vpop.f32.mrf.mxu0
    %500 = vdwg.mxu0
    %v509 = vunpack.c.l.b16 %v349
    %v510 = vunpack.c.l.b16 %v350
    %v511 = vunpack.c.l.b16 %v351
    %v512 = vunpack.c.l.b16 %v352
    %v513 = vunpack.c.l.b16 %v353
    %v514 = vunpack.c.l.b16 %v354
    %v515 = vunpack.c.l.b16 %v355
    %v516 = vunpack.c.l.b16 %v356
    %v517 = vpack.c.b16 %v510, %v509
    %v518 = vpack.c.b16 %v512, %v511
    %v519 = vpack.c.b16 %v514, %v513
    %v520 = vpack.c.b16 %v516, %v515
    %v522 = vsel %vm205, %v438, 0
    %v525 = vsel %vm205, %v517, 0
    %v528 = vsel %vm205, %v518, 0
    %v531 = vsel %vm205, %v519, 0
    %v534 = vsel %vm205, %v520, 0
    %536 = vmatpush.bf16.xpose.msra.mxu0 0
    %537 = vmatpush.bf16.xpose.msra.mxu0 0
    %538 = vmatpush.bf16.xpose.msra.mxu0 0
    %539 = vmatpush.bf16.xpose.msra.mxu0 0
    %540 = vmatpush.bf16.xpose.msra.mxu0 %v534
    %541 = vmatpush.bf16.xpose.msra.mxu0 %v531
    %542 = vmatpush.bf16.xpose.msra.mxu0 %v528
    %543 = vmatpush.bf16.xpose.msra.mxu0 %v525
    %544 = vmatmul.bf16.gmra.mxu0 %v522
    %v545 = vpop.f32.mrf.mxu0
    %v546 = vadd.f32 %v446, %v545
    %v547 = vpop.f32.mrf.mxu0
    %548 = vdwg.mxu0
    %v557 = vunpack.c.l.b16 %v357
    %v558 = vunpack.c.l.b16 %v358
    %v559 = vunpack.c.l.b16 %v359
    %v560 = vunpack.c.l.b16 %v360
    %v561 = vunpack.c.l.b16 %v361
    %v562 = vunpack.c.l.b16 %v362
    %v563 = vunpack.c.l.b16 %v363
    %v564 = vunpack.c.l.b16 %v364
    %v565 = vpack.c.b16 %v558, %v557
    %v566 = vpack.c.b16 %v560, %v559
    %v567 = vpack.c.b16 %v562, %v561
    %v568 = vpack.c.b16 %v564, %v563
    %v570 = vsel %vm205, %v439, 0
    %v573 = vsel %vm205, %v565, 0
    %v576 = vsel %vm205, %v566, 0
    %v579 = vsel %vm205, %v567, 0
    %v582 = vsel %vm205, %v568, 0
    %584 = vmatpush.bf16.xpose.msra.mxu0 0
    %585 = vmatpush.bf16.xpose.msra.mxu0 0
    %586 = vmatpush.bf16.xpose.msra.mxu0 0
    %587 = vmatpush.bf16.xpose.msra.mxu0 0
    %588 = vmatpush.bf16.xpose.msra.mxu0 %v582
    %589 = vmatpush.bf16.xpose.msra.mxu0 %v579
    %590 = vmatpush.bf16.xpose.msra.mxu0 %v576
    %591 = vmatpush.bf16.xpose.msra.mxu0 %v573
    %592 = vmatmul.bf16.gmra.mxu0 %v570
    %v593 = vpop.f32.mrf.mxu0
    %v594 = vadd.f32 %v447, %v593
    %v595 = vpop.f32.mrf.mxu0
    %596 = vdwg.mxu0
    %v605 = vunpack.c.l.b16 %v365
    %v606 = vunpack.c.l.b16 %v366
    %v607 = vunpack.c.l.b16 %v367
    %v608 = vunpack.c.l.b16 %v368
    %v609 = vunpack.c.l.b16 %v369
    %v610 = vunpack.c.l.b16 %v370
    %v611 = vunpack.c.l.b16 %v371
    %v612 = vunpack.c.l.b16 %v372
    %v613 = vpack.c.b16 %v606, %v605
    %v614 = vpack.c.b16 %v608, %v607
    %v615 = vpack.c.b16 %v610, %v609
    %v616 = vpack.c.b16 %v612, %v611
    %v618 = vsel %vm205, %v440, 0
    %v621 = vsel %vm205, %v613, 0
    %v624 = vsel %vm205, %v614, 0
    %v627 = vsel %vm205, %v615, 0
    %v630 = vsel %vm205, %v616, 0
    %632 = vmatpush.bf16.xpose.msra.mxu0 0
    %633 = vmatpush.bf16.xpose.msra.mxu0 0
    %634 = vmatpush.bf16.xpose.msra.mxu0 0
    %635 = vmatpush.bf16.xpose.msra.mxu0 0
    %636 = vmatpush.bf16.xpose.msra.mxu0 %v630
    %637 = vmatpush.bf16.xpose.msra.mxu0 %v627
    %638 = vmatpush.bf16.xpose.msra.mxu0 %v624
    %639 = vmatpush.bf16.xpose.msra.mxu0 %v621
    %640 = vmatmul.bf16.gmra.mxu0 %v618
    %v641 = vpop.f32.mrf.mxu0
    %v642 = vadd.f32 %v448, %v641
    %v643 = vpop.f32.mrf.mxu0
    %644 = vdwg.mxu0
    %vm645 = vcmask 523264
    %v646 = vsel %vm645, %v498, -inf
    %647 = vmax.xlane.f32.xlu0 %v646
    %v648 = vpop.xlane.xlu0 %647
    %v649 = vsel %vm645, %v546, -inf
    %650 = vmax.xlane.f32.xlu0 %v649
    %v651 = vpop.xlane.xlu0 %650
    %v652 = vsel %vm645, %v594, -inf
    %653 = vmax.xlane.f32.xlu0 %v652
    %v654 = vpop.xlane.xlu0 %653
    %v655 = vsel %vm645, %v642, -inf
    %656 = vmax.xlane.f32.xlu0 %v655
    %v657 = vpop.xlane.xlu0 %656
    %v658 = vsub.f32 %v498, %v648
    %v659 = vsub.f32 %v546, %v651
    %v660 = vsub.f32 %v594, %v654
    %v661 = vsub.f32 %v642, %v657
    %v662 = vmul.f32 %v658, 1.442695
    %v663 = vpow.pop %v662
    %v664 = vmul.f32 %v659, 1.442695
    %v665 = vpow.pop %v664
    %v666 = vmul.f32 %v660, 1.442695
    %v667 = vpow.pop %v666
    %v668 = vmul.f32 %v661, 1.442695
    %v669 = vpow.pop %v668
    %v670 = vpack.c.bf16 %v663, %v663
    %v671 = vpack.c.bf16 %v665, %v665
    %v672 = vpack.c.bf16 %v667, %v667
    %v673 = vpack.c.bf16 %v669, %v669
    %v682 = vunpack.c.l.b16 %v405
    %v683 = vunpack.c.l.b16 %v406
    %v684 = vunpack.c.l.b16 %v407
    %v685 = vunpack.c.l.b16 %v408
    %v686 = vunpack.c.l.b16 %v409
    %v687 = vunpack.c.l.b16 %v410
    %v688 = vunpack.c.l.b16 %v411
    %v689 = vunpack.c.l.b16 %v412
    %v690 = vpack.c.b16 %v683, %v682
    %v691 = vpack.c.b16 %v685, %v684
    %v692 = vpack.c.b16 %v687, %v686
    %v693 = vpack.c.b16 %v689, %v688
    %v699 = vsel %vm645, %v670, 0
    %701 = vmatpush.bf16.msra.mxu0 0
    %702 = vmatpush.bf16.msra.mxu0 0
    %703 = vmatpush.bf16.msra.mxu0 0
    %704 = vmatpush.bf16.msra.mxu0 0
    %705 = vmatpush.bf16.msra.mxu0 %v693
    %706 = vmatpush.bf16.msra.mxu0 %v692
    %707 = vmatpush.bf16.msra.mxu0 %v691
    %708 = vmatpush.bf16.msra.mxu0 %v690
    %709 = vmatmul.bf16.gmra.mxu0 %v699
    %v710 = vpop.f32.mrf.mxu0
    %v711 = vadd.f32 0.0, %v710
    %v712 = vpop.f32.mrf.mxu0
    %713 = vdwg.mxu0
    %v722 = vunpack.c.l.b16 %v413
    %v723 = vunpack.c.l.b16 %v414
    %v724 = vunpack.c.l.b16 %v415
    %v725 = vunpack.c.l.b16 %v416
    %v726 = vunpack.c.l.b16 %v417
    %v727 = vunpack.c.l.b16 %v418
    %v728 = vunpack.c.l.b16 %v419
    %v729 = vunpack.c.l.b16 %v420
    %v730 = vpack.c.b16 %v723, %v722
    %v731 = vpack.c.b16 %v725, %v724
    %v732 = vpack.c.b16 %v727, %v726
    %v733 = vpack.c.b16 %v729, %v728
    %v739 = vsel %vm645, %v671, 0
    %741 = vmatpush.bf16.msra.mxu0 0
    %742 = vmatpush.bf16.msra.mxu0 0
    %743 = vmatpush.bf16.msra.mxu0 0
    %744 = vmatpush.bf16.msra.mxu0 0
    %745 = vmatpush.bf16.msra.mxu0 %v733
    %746 = vmatpush.bf16.msra.mxu0 %v732
    %747 = vmatpush.bf16.msra.mxu0 %v731
    %748 = vmatpush.bf16.msra.mxu0 %v730
    %749 = vmatmul.bf16.gmra.mxu0 %v739
    %v750 = vpop.f32.mrf.mxu0
    %v751 = vadd.f32 0.0, %v750
    %v752 = vpop.f32.mrf.mxu0
    %753 = vdwg.mxu0
    %v762 = vunpack.c.l.b16 %v421
    %v763 = vunpack.c.l.b16 %v422
    %v764 = vunpack.c.l.b16 %v423
    %v765 = vunpack.c.l.b16 %v424
    %v766 = vunpack.c.l.b16 %v425
    %v767 = vunpack.c.l.b16 %v426
    %v768 = vunpack.c.l.b16 %v427
    %v769 = vunpack.c.l.b16 %v428
    %v770 = vpack.c.b16 %v763, %v762
    %v771 = vpack.c.b16 %v765, %v764
    %v772 = vpack.c.b16 %v767, %v766
    %v773 = vpack.c.b16 %v769, %v768
    %v779 = vsel %vm645, %v672, 0
    %781 = vmatpush.bf16.msra.mxu0 0
    %782 = vmatpush.bf16.msra.mxu0 0
    %783 = vmatpush.bf16.msra.mxu0 0
    %784 = vmatpush.bf16.msra.mxu0 0
    %785 = vmatpush.bf16.msra.mxu0 %v773
    %786 = vmatpush.bf16.msra.mxu0 %v772
    %787 = vmatpush.bf16.msra.mxu0 %v771
    %788 = vmatpush.bf16.msra.mxu0 %v770
    %789 = vmatmul.bf16.gmra.mxu0 %v779
    %v790 = vpop.f32.mrf.mxu0
    %v791 = vadd.f32 0.0, %v790
    %v792 = vpop.f32.mrf.mxu0
    %793 = vdwg.mxu0
    %v802 = vunpack.c.l.b16 %v429
    %v803 = vunpack.c.l.b16 %v430
    %v804 = vunpack.c.l.b16 %v431
    %v805 = vunpack.c.l.b16 %v432
    %v806 = vunpack.c.l.b16 %v433
    %v807 = vunpack.c.l.b16 %v434
    %v808 = vunpack.c.l.b16 %v435
    %v809 = vunpack.c.l.b16 %v436
    %v810 = vpack.c.b16 %v803, %v802
    %v811 = vpack.c.b16 %v805, %v804
    %v812 = vpack.c.b16 %v807, %v806
    %v813 = vpack.c.b16 %v809, %v808
    %v819 = vsel %vm645, %v673, 0
    %821 = vmatpush.bf16.msra.mxu0 0
    %822 = vmatpush.bf16.msra.mxu0 0
    %823 = vmatpush.bf16.msra.mxu0 0
    %824 = vmatpush.bf16.msra.mxu0 0
    %825 = vmatpush.bf16.msra.mxu0 %v813
    %826 = vmatpush.bf16.msra.mxu0 %v812
    %827 = vmatpush.bf16.msra.mxu0 %v811
    %828 = vmatpush.bf16.msra.mxu0 %v810
    %829 = vmatmul.bf16.gmra.mxu0 %v819
    %v830 = vpop.f32.mrf.mxu0
    %v831 = vadd.f32 0.0, %v830
    %v832 = vpop.f32.mrf.mxu0
    %833 = vdwg.mxu0
    %v834 = vpack.c.bf16 %v665, %v663
    %v835 = vpack.c.bf16 %v669, %v667
    %v844 = vunpack.c.l.b16 %v172
    %v845 = vunpack.c.l.b16 %v173
    %v846 = vunpack.c.l.b16 %v174
    %v847 = vunpack.c.l.b16 %v175
    %v848 = vunpack.c.l.b16 %v176
    %v849 = vunpack.c.l.b16 %v177
    %v850 = vunpack.c.l.b16 %v178
    %v851 = vunpack.c.l.b16 %v179
    %v852 = vpack.c.b16 %v845, %v844
    %v853 = vpack.c.b16 %v847, %v846
    %v854 = vpack.c.b16 %v849, %v848
    %v855 = vpack.c.b16 %v851, %v850
    %v861 = vsel %vm645, %v834, 0
    %v864 = vsel %vm645, %v835, 0
    %866 = vmatpush.bf16.msra.mxu0 0
    %867 = vmatpush.bf16.msra.mxu0 0
    %868 = vmatpush.bf16.msra.mxu0 0
    %869 = vmatpush.bf16.msra.mxu0 0
    %870 = vmatpush.bf16.msra.mxu0 %v855
    %871 = vmatpush.bf16.msra.mxu0 %v854
    %872 = vmatpush.bf16.msra.mxu0 %v853
    %873 = vmatpush.bf16.msra.mxu0 %v852
    %874 = vmatmul.bf16.gmra.mxu0 %v861
    %v875 = vpop.f32.mrf.mxu0
    %v876 = vadd.f32 0.0, %v875
    %v877 = vpop.f32.mrf.mxu0
    %v878 = vadd.f32 0.0, %v877
    %879 = vmatmul.bf16.gmra.mxu0 %v864
    %v880 = vpop.f32.mrf.mxu0
    %v881 = vadd.f32 0.0, %v880
    %v882 = vpop.f32.mrf.mxu0
    %v883 = vadd.f32 0.0, %v882
    %884 = vdwg.mxu0
    %vm885 = vcmask 64512
    %v887 = vsel %vm885, %v876, 0
    %v890 = vsel %vm885, %v878, 0
    %v893 = vsel %vm885, %v881, 0
    %v896 = vsel %vm885, %v883, 0
    %898 = vmatpush.msra.mxu0 0.0
    %899 = vmatpush.msra.mxu0 0.0
    %900 = vmatpush.msra.mxu0 0.0
    %901 = vmatpush.msra.mxu0 0.0
    %902 = vmatpush.msra.mxu0 0.0
    %903 = vmatpush.msra.mxu0 0.0
    %904 = vmatpush.msra.mxu0 0.0
    %905 = vmatpush.msra.mxu0 0.0
    %906 = vmatpush.msra.mxu0 0.0
    %907 = vmatpush.msra.mxu0 0.0
    %908 = vmatpush.msra.mxu0 0.0
    %909 = vmatpush.msra.mxu0 0.0
    %910 = vmatpush.msra.mxu0 0.0
    %911 = vmatpush.msra.mxu0 0.0
    %912 = vmatpush.msra.mxu0 0.0
    %913 = vmatpush.msra.mxu0 %v180
    %914 = vmatmul.f32.gmra.mxu0 %v887
    %v915 = vpop.f32.mrf.mxu0
    %v916 = vadd.f32 0.0, %v915
    %917 = vmatmul.f32.gmra.mxu0 %v890
    %v918 = vpop.f32.mrf.mxu0
    %v919 = vadd.f32 0.0, %v918
    %920 = vmatmul.f32.gmra.mxu0 %v893
    %v921 = vpop.f32.mrf.mxu0
    %v922 = vadd.f32 0.0, %v921
    %923 = vmatmul.f32.gmra.mxu0 %v896
    %v924 = vpop.f32.mrf.mxu0
    %v925 = vadd.f32 0.0, %v924
    %926 = vdwg.mxu0
    %v927 = vrcp.pop %v916
    %v928 = vrcp.pop %v919
    %v929 = vrcp.pop %v922
    %v930 = vrcp.pop %v925
    %v931 = vmul.f32 %v711, %v927
    %v932 = vmul.f32 %v751, %v928
    %v933 = vmul.f32 %v791, %v929
    %v934 = vmul.f32 %v831, %v930
    %v935 = vpack.c.bf16 %v932, %v931
    %v936 = vpack.c.bf16 %v934, %v933
    %v937 = vld [vmem:[%s13] sm:$0xf]
    %v938 = vld [vmem:[%s13 + $0x4] sm:$0xf]
    %v939 = vld [vmem:[%s13 + $0x8] sm:$0xf]
    %v940 = vld [vmem:[%s13 + $0xc] sm:$0xf]
    %v941 = vld [vmem:[%s14] sm:$0x1]
    %v943 = vperm.slane %v941, 0
    %v949 = vunpack.c.l.b16 %v937
    %v950 = vunpack.c.l.b16 %v938
    %v951 = vunpack.c.l.b16 %v939
    %v952 = vunpack.c.l.b16 %v940
    %v953 = vpack.c.b16 %v950, %v949
    %v954 = vpack.c.b16 %v952, %v951
    %v958 = vsel %vm205, %v935, 0
    %v961 = vsel %vm205, %v936, 0
    %963 = vmatpush.bf16.msra.mxu0 0
    %964 = vmatpush.bf16.msra.mxu0 0
    %965 = vmatpush.bf16.msra.mxu0 0
    %966 = vmatpush.bf16.msra.mxu0 0
    %967 = vmatpush.bf16.msra.mxu0 0
    %968 = vmatpush.bf16.msra.mxu0 0
    %969 = vmatpush.bf16.msra.mxu0 %v954
    %970 = vmatpush.bf16.msra.mxu0 %v953
    %971 = vmatmul.bf16.gmra.mxu0 %v958
    %v972 = vpop.f32.mrf.mxu0
    %v973 = vadd.f32 %v943, %v972
    %v974 = vpop.f32.mrf.mxu0
    %v975 = vadd.f32 %v943, %v974
    %976 = vmatmul.bf16.gmra.mxu0 %v961
    %v977 = vpop.f32.mrf.mxu0
    %v978 = vadd.f32 %v943, %v977
    %v979 = vpop.f32.mrf.mxu0
    %v980 = vadd.f32 %v943, %v979
    %981 = vdwg.mxu0
    %v982 = vadd.f32 %v973, %v151
    %v983 = vadd.f32 %v975, %v153
    %v984 = vadd.f32 %v978, %v156
    %v985 = vadd.f32 %v980, %v158
    %v986 = vsel %vm205, %v982, 0.0
    %987 = vadd.xlane.f32.xlu0 %v986
    %v988 = vpop.xlane.xlu0 %987
    %v989 = vsel %vm205, %v983, 0.0
    %990 = vadd.xlane.f32.xlu0 %v989
    %v991 = vpop.xlane.xlu0 %990
    %v992 = vsel %vm205, %v984, 0.0
    %993 = vadd.xlane.f32.xlu0 %v992
    %v994 = vpop.xlane.xlu0 %993
    %v995 = vsel %vm205, %v985, 0.0
    %996 = vadd.xlane.f32.xlu0 %v995
    %v997 = vpop.xlane.xlu0 %996
    %v998 = vrcp.pop 32.0
    %v999 = vmul.f32 32.0, %v998
    %v1000 = vsub.f32 1.0, %v999
    %v1001 = vmul.f32 %v998, %v1000
    %v1002 = vadd.f32 %v998, %v1001
    %vm1003 = vweird.f32 %v998
    %v1004 = vsel %vm1003, %v998, %v1002
    %v1005 = vmul.f32 %v988, %v1004
    %v1006 = vmul.f32 %v991, %v1004
    %v1007 = vmul.f32 %v994, %v1004
    %v1008 = vmul.f32 %v997, %v1004
    %v1009 = vsub.f32 %v982, %v1005
    %v1010 = vsub.f32 %v983, %v1006
    %v1011 = vsub.f32 %v984, %v1007
    %v1012 = vsub.f32 %v985, %v1008
    %v1013 = vmul.f32 %v1009, %v1009
    %v1014 = vmul.f32 %v1010, %v1010
    %v1015 = vmul.f32 %v1011, %v1011
    %v1016 = vmul.f32 %v1012, %v1012
    %v1017 = vsel %vm205, %v1013, 0.0
    %1018 = vadd.xlane.f32.xlu0 %v1017
    %v1019 = vpop.xlane.xlu0 %1018
    %v1020 = vsel %vm205, %v1014, 0.0
    %1021 = vadd.xlane.f32.xlu0 %v1020
    %v1022 = vpop.xlane.xlu0 %1021
    %v1023 = vsel %vm205, %v1015, 0.0
    %1024 = vadd.xlane.f32.xlu0 %v1023
    %v1025 = vpop.xlane.xlu0 %1024
    %v1026 = vsel %vm205, %v1016, 0.0
    %1027 = vadd.xlane.f32.xlu0 %v1026
    %v1028 = vpop.xlane.xlu0 %1027
    %v1029 = vmul.f32 %v1019, %v1004
    %v1030 = vmul.f32 %v1022, %v1004
    %v1031 = vmul.f32 %v1025, %v1004
    %v1032 = vmul.f32 %v1028, %v1004
    %v1033 = vadd.f32 %v1029, 1e-05
    %v1034 = vadd.f32 %v1030, 1e-05
    %v1035 = vadd.f32 %v1031, 1e-05
    %v1036 = vadd.f32 %v1032, 1e-05
    %v1037 = vrsqrt.pop %v1033
    %v1038 = vmul.f32 %v1037, %v1033
    %v1039 = vmul.f32 %v1038, %v1037
    %v1040 = vmul.f32 0.5, %v1039
    %v1041 = vsub.f32 1.5, %v1040
    %v1042 = vmul.f32 %v1037, %v1041
    %vm1043 = vweird.f32 %v1033
    %vm1044 = vweird.f32 %v1037
    %vm1045 = vmor %vm1043, %vm1044
    %v1046 = vsel %vm1045, %v1037, %v1042
    %v1047 = vrsqrt.pop %v1034
    %v1048 = vmul.f32 %v1047, %v1034
    %v1049 = vmul.f32 %v1048, %v1047
    %v1050 = vmul.f32 0.5, %v1049
    %v1051 = vsub.f32 1.5, %v1050
    %v1052 = vmul.f32 %v1047, %v1051
    %vm1053 = vweird.f32 %v1034
    %vm1054 = vweird.f32 %v1047
    %vm1055 = vmor %vm1053, %vm1054
    %v1056 = vsel %vm1055, %v1047, %v1052
    %v1057 = vrsqrt.pop %v1035
    %v1058 = vmul.f32 %v1057, %v1035
    %v1059 = vmul.f32 %v1058, %v1057
    %v1060 = vmul.f32 0.5, %v1059
    %v1061 = vsub.f32 1.5, %v1060
    %v1062 = vmul.f32 %v1057, %v1061
    %vm1063 = vweird.f32 %v1035
    %vm1064 = vweird.f32 %v1057
    %vm1065 = vmor %vm1063, %vm1064
    %v1066 = vsel %vm1065, %v1057, %v1062
    %v1067 = vrsqrt.pop %v1036
    %v1068 = vmul.f32 %v1067, %v1036
    %v1069 = vmul.f32 %v1068, %v1067
    %v1070 = vmul.f32 0.5, %v1069
    %v1071 = vsub.f32 1.5, %v1070
    %v1072 = vmul.f32 %v1067, %v1071
    %vm1073 = vweird.f32 %v1036
    %vm1074 = vweird.f32 %v1067
    %vm1075 = vmor %vm1073, %vm1074
    %v1076 = vsel %vm1075, %v1067, %v1072
    %v1077 = vmul.f32 %v1009, %v1046
    %v1078 = vmul.f32 %v1010, %v1056
    %v1079 = vmul.f32 %v1011, %v1066
    %v1080 = vmul.f32 %v1012, %v1076
    %v1082 = vperm.slane %v181, 0
    %v1084 = vmul.f32 %v1077, %v1082
    %v1085 = vmul.f32 %v1078, %v1082
    %v1086 = vmul.f32 %v1079, %v1082
    %v1087 = vmul.f32 %v1080, %v1082
    %v1089 = vperm.slane %v182, 0
    %v1091 = vadd.f32 %v1084, %v1089
    %v1092 = vadd.f32 %v1085, %v1089
    %v1093 = vadd.f32 %v1086, %v1089
    %v1094 = vadd.f32 %v1087, %v1089
    %v1095 = vpack.c.bf16 %v1092, %v1091
    %v1096 = vpack.c.bf16 %v1094, %v1093
    %s1097 = scalar_lea.vmem %s7, 16
    %v1098 = vld [vmem:[%s1097] sm:$0xf]
    %v1099 = vld [vmem:[%s1097 + $0x4] sm:$0xf]
    %v1100 = vld [vmem:[%s1097 + $0x8] sm:$0xf]
    %v1101 = vld [vmem:[%s1097 + $0xc] sm:$0xf]
    %s1102 = scalar_lea.vmem %s10, 1
    %v1103 = vld [vmem:[%s1102] sm:$0x1]
    %v1105 = vperm.slane %v1103, 0
    %v1111 = vunpack.c.l.b16 %v1098
    %v1112 = vunpack.c.l.b16 %v1099
    %v1113 = vunpack.c.l.b16 %v1100
    %v1114 = vunpack.c.l.b16 %v1101
    %v1115 = vpack.c.b16 %v1112, %v1111
    %v1116 = vpack.c.b16 %v1114, %v1113
    %v1120 = vsel %vm205, %v1095, 0
    %v1123 = vsel %vm205, %v1096, 0
    %1125 = vmatpush.bf16.msra.mxu0 0
    %1126 = vmatpush.bf16.msra.mxu0 0
    %1127 = vmatpush.bf16.msra.mxu0 0
    %1128 = vmatpush.bf16.msra.mxu0 0
    %1129 = vmatpush.bf16.msra.mxu0 0
    %1130 = vmatpush.bf16.msra.mxu0 0
    %1131 = vmatpush.bf16.msra.mxu0 %v1116
    %1132 = vmatpush.bf16.msra.mxu0 %v1115
    %1133 = vmatmul.bf16.gmra.mxu0 %v1120
    %v1134 = vpop.f32.mrf.mxu0
    %v1135 = vadd.f32 %v1105, %v1134
    %v1136 = vpop.f32.mrf.mxu0
    %v1137 = vadd.f32 %v1105, %v1136
    %1138 = vmatmul.bf16.gmra.mxu0 %v1123
    %v1139 = vpop.f32.mrf.mxu0
    %v1140 = vadd.f32 %v1105, %v1139
    %v1141 = vpop.f32.mrf.mxu0
    %v1142 = vadd.f32 %v1105, %v1141
    %1143 = vdwg.mxu0
    %s1144 = scalar_lea.vmem %s8, 16
    %v1145 = vld [vmem:[%s1144] sm:$0xf]
    %v1146 = vld [vmem:[%s1144 + $0x4] sm:$0xf]
    %v1147 = vld [vmem:[%s1144 + $0x8] sm:$0xf]
    %v1148 = vld [vmem:[%s1144 + $0xc] sm:$0xf]
    %s1149 = scalar_lea.vmem %s11, 1
    %v1150 = vld [vmem:[%s1149] sm:$0x1]
    %v1152 = vperm.slane %v1150, 0
    %v1158 = vunpack.c.l.b16 %v1145
    %v1159 = vunpack.c.l.b16 %v1146
    %v1160 = vunpack.c.l.b16 %v1147
    %v1161 = vunpack.c.l.b16 %v1148
    %v1162 = vpack.c.b16 %v1159, %v1158
    %v1163 = vpack.c.b16 %v1161, %v1160
    %1166 = vmatpush.bf16.msra.mxu0 0
    %1167 = vmatpush.bf16.msra.mxu0 0
    %1168 = vmatpush.bf16.msra.mxu0 0
    %1169 = vmatpush.bf16.msra.mxu0 0
    %1170 = vmatpush.bf16.msra.mxu0 0
    %1171 = vmatpush.bf16.msra.mxu0 0
    %1172 = vmatpush.bf16.msra.mxu0 %v1163
    %1173 = vmatpush.bf16.msra.mxu0 %v1162
    %1174 = vmatmul.bf16.gmra.mxu0 %v1120
    %v1175 = vpop.f32.mrf.mxu0
    %v1176 = vadd.f32 %v1152, %v1175
    %v1177 = vpop.f32.mrf.mxu0
    %v1178 = vadd.f32 %v1152, %v1177
    %1179 = vmatmul.bf16.gmra.mxu0 %v1123
    %v1180 = vpop.f32.mrf.mxu0
    %v1181 = vadd.f32 %v1152, %v1180
    %v1182 = vpop.f32.mrf.mxu0
    %v1183 = vadd.f32 %v1152, %v1182
    %1184 = vdwg.mxu0
    %s1185 = scalar_lea.vmem %s9, 16
    %v1186 = vld [vmem:[%s1185] sm:$0xf]
    %v1187 = vld [vmem:[%s1185 + $0x4] sm:$0xf]
    %v1188 = vld [vmem:[%s1185 + $0x8] sm:$0xf]
    %v1189 = vld [vmem:[%s1185 + $0xc] sm:$0xf]
    %s1190 = scalar_lea.vmem %s12, 1
    %v1191 = vld [vmem:[%s1190] sm:$0x1]
    %v1193 = vperm.slane %v1191, 0
    %v1199 = vunpack.c.l.b16 %v1186
    %v1200 = vunpack.c.l.b16 %v1187
    %v1201 = vunpack.c.l.b16 %v1188
    %v1202 = vunpack.c.l.b16 %v1189
    %v1203 = vpack.c.b16 %v1200, %v1199
    %v1204 = vpack.c.b16 %v1202, %v1201
    %1207 = vmatpush.bf16.msra.mxu0 0
    %1208 = vmatpush.bf16.msra.mxu0 0
    %1209 = vmatpush.bf16.msra.mxu0 0
    %1210 = vmatpush.bf16.msra.mxu0 0
    %1211 = vmatpush.bf16.msra.mxu0 0
    %1212 = vmatpush.bf16.msra.mxu0 0
    %1213 = vmatpush.bf16.msra.mxu0 %v1204
    %1214 = vmatpush.bf16.msra.mxu0 %v1203
    %1215 = vmatmul.bf16.gmra.mxu0 %v1120
    %v1216 = vpop.f32.mrf.mxu0
    %v1217 = vadd.f32 %v1193, %v1216
    %v1218 = vpop.f32.mrf.mxu0
    %v1219 = vadd.f32 %v1193, %v1218
    %1220 = vmatmul.bf16.gmra.mxu0 %v1123
    %v1221 = vpop.f32.mrf.mxu0
    %v1222 = vadd.f32 %v1193, %v1221
    %v1223 = vpop.f32.mrf.mxu0
    %v1224 = vadd.f32 %v1193, %v1223
    %1225 = vdwg.mxu0
    %v1226 = vmul.f32 %v1176, %v164
    %v1227 = vmul.f32 %v1176, %v165
    %v1228 = vmul.f32 %v1176, %v166
    %v1229 = vmul.f32 %v1176, %v167
    %v1230 = vmul.f32 %v1176, %v168
    %v1231 = vmul.f32 %v1176, %v169
    %v1232 = vmul.f32 %v1176, %v170
    %v1233 = vmul.f32 %v1176, %v171
    %v1234 = vmul.f32 %v1178, %v164
    %v1235 = vmul.f32 %v1178, %v165
    %v1236 = vmul.f32 %v1178, %v166
    %v1237 = vmul.f32 %v1178, %v167
    %v1238 = vmul.f32 %v1178, %v168
    %v1239 = vmul.f32 %v1178, %v169
    %v1240 = vmul.f32 %v1178, %v170
    %v1241 = vmul.f32 %v1178, %v171
    %v1242 = vmul.f32 %v1181, %v164
    %v1243 = vmul.f32 %v1181, %v165
    %v1244 = vmul.f32 %v1181, %v166
    %v1245 = vmul.f32 %v1181, %v167
    %v1246 = vmul.f32 %v1181, %v168
    %v1247 = vmul.f32 %v1181, %v169
    %v1248 = vmul.f32 %v1181, %v170
    %v1249 = vmul.f32 %v1181, %v171
    %v1250 = vmul.f32 %v1183, %v164
    %v1251 = vmul.f32 %v1183, %v165
    %v1252 = vmul.f32 %v1183, %v166
    %v1253 = vmul.f32 %v1183, %v167
    %v1254 = vmul.f32 %v1183, %v168
    %v1255 = vmul.f32 %v1183, %v169
    %v1256 = vmul.f32 %v1183, %v170
    %v1257 = vmul.f32 %v1183, %v171
    %v1258 = vpack.c.bf16 %v1226, %v1226
    %v1259 = vpack.c.bf16 %v1227, %v1227
    %v1260 = vpack.c.bf16 %v1228, %v1228
    %v1261 = vpack.c.bf16 %v1229, %v1229
    %v1262 = vpack.c.bf16 %v1230, %v1230
    %v1263 = vpack.c.bf16 %v1231, %v1231
    %v1264 = vpack.c.bf16 %v1232, %v1232
    %v1265 = vpack.c.bf16 %v1233, %v1233
    %v1266 = vpack.c.bf16 %v1234, %v1234
    %v1267 = vpack.c.bf16 %v1235, %v1235
    %v1268 = vpack.c.bf16 %v1236, %v1236
    %v1269 = vpack.c.bf16 %v1237, %v1237
    %v1270 = vpack.c.bf16 %v1238, %v1238
    %v1271 = vpack.c.bf16 %v1239, %v1239
    %v1272 = vpack.c.bf16 %v1240, %v1240
    %v1273 = vpack.c.bf16 %v1241, %v1241
    %v1274 = vpack.c.bf16 %v1242, %v1242
    %v1275 = vpack.c.bf16 %v1243, %v1243
    %v1276 = vpack.c.bf16 %v1244, %v1244
    %v1277 = vpack.c.bf16 %v1245, %v1245
    %v1278 = vpack.c.bf16 %v1246, %v1246
    %v1279 = vpack.c.bf16 %v1247, %v1247
    %v1280 = vpack.c.bf16 %v1248, %v1248
    %v1281 = vpack.c.bf16 %v1249, %v1249
    %v1282 = vpack.c.bf16 %v1250, %v1250
    %v1283 = vpack.c.bf16 %v1251, %v1251
    %v1284 = vpack.c.bf16 %v1252, %v1252
    %v1285 = vpack.c.bf16 %v1253, %v1253
    %v1286 = vpack.c.bf16 %v1254, %v1254
    %v1287 = vpack.c.bf16 %v1255, %v1255
    %v1288 = vpack.c.bf16 %v1256, %v1256
    %v1289 = vpack.c.bf16 %v1257, %v1257
    %v1290 = vmul.f32 %v1217, %v164
    %v1291 = vmul.f32 %v1217, %v165
    %v1292 = vmul.f32 %v1217, %v166
    %v1293 = vmul.f32 %v1217, %v167
    %v1294 = vmul.f32 %v1217, %v168
    %v1295 = vmul.f32 %v1217, %v169
    %v1296 = vmul.f32 %v1217, %v170
    %v1297 = vmul.f32 %v1217, %v171
    %v1298 = vmul.f32 %v1219, %v164
    %v1299 = vmul.f32 %v1219, %v165
    %v1300 = vmul.f32 %v1219, %v166
    %v1301 = vmul.f32 %v1219, %v167
    %v1302 = vmul.f32 %v1219, %v168
    %v1303 = vmul.f32 %v1219, %v169
    %v1304 = vmul.f32 %v1219, %v170
    %v1305 = vmul.f32 %v1219, %v171
    %v1306 = vmul.f32 %v1222, %v164
    %v1307 = vmul.f32 %v1222, %v165
    %v1308 = vmul.f32 %v1222, %v166
    %v1309 = vmul.f32 %v1222, %v167
    %v1310 = vmul.f32 %v1222, %v168
    %v1311 = vmul.f32 %v1222, %v169
    %v1312 = vmul.f32 %v1222, %v170
    %v1313 = vmul.f32 %v1222, %v171
    %v1314 = vmul.f32 %v1224, %v164
    %v1315 = vmul.f32 %v1224, %v165
    %v1316 = vmul.f32 %v1224, %v166
    %v1317 = vmul.f32 %v1224, %v167
    %v1318 = vmul.f32 %v1224, %v168
    %v1319 = vmul.f32 %v1224, %v169
    %v1320 = vmul.f32 %v1224, %v170
    %v1321 = vmul.f32 %v1224, %v171
    %v1322 = vpack.c.bf16 %v1290, %v1290
    %v1323 = vpack.c.bf16 %v1291, %v1291
    %v1324 = vpack.c.bf16 %v1292, %v1292
    %v1325 = vpack.c.bf16 %v1293, %v1293
    %v1326 = vpack.c.bf16 %v1294, %v1294
    %v1327 = vpack.c.bf16 %v1295, %v1295
    %v1328 = vpack.c.bf16 %v1296, %v1296
    %v1329 = vpack.c.bf16 %v1297, %v1297
    %v1330 = vpack.c.bf16 %v1298, %v1298
    %v1331 = vpack.c.bf16 %v1299, %v1299
    %v1332 = vpack.c.bf16 %v1300, %v1300
    %v1333 = vpack.c.bf16 %v1301, %v1301
    %v1334 = vpack.c.bf16 %v1302, %v1302
    %v1335 = vpack.c.bf16 %v1303, %v1303
    %v1336 = vpack.c.bf16 %v1304, %v1304
    %v1337 = vpack.c.bf16 %v1305, %v1305
    %v1338 = vpack.c.bf16 %v1306, %v1306
    %v1339 = vpack.c.bf16 %v1307, %v1307
    %v1340 = vpack.c.bf16 %v1308, %v1308
    %v1341 = vpack.c.bf16 %v1309, %v1309
    %v1342 = vpack.c.bf16 %v1310, %v1310
    %v1343 = vpack.c.bf16 %v1311, %v1311
    %v1344 = vpack.c.bf16 %v1312, %v1312
    %v1345 = vpack.c.bf16 %v1313, %v1313
    %v1346 = vpack.c.bf16 %v1314, %v1314
    %v1347 = vpack.c.bf16 %v1315, %v1315
    %v1348 = vpack.c.bf16 %v1316, %v1316
    %v1349 = vpack.c.bf16 %v1317, %v1317
    %v1350 = vpack.c.bf16 %v1318, %v1318
    %v1351 = vpack.c.bf16 %v1319, %v1319
    %v1352 = vpack.c.bf16 %v1320, %v1320
    %v1353 = vpack.c.bf16 %v1321, %v1321
    %v1354 = vpack.c.bf16 %v1135, %v1135
    %v1355 = vpack.c.bf16 %v1137, %v1137
    %v1356 = vpack.c.bf16 %v1140, %v1140
    %v1357 = vpack.c.bf16 %v1142, %v1142
    %v1366 = vunpack.c.l.b16 %v1258
    %v1367 = vunpack.c.l.b16 %v1259
    %v1368 = vunpack.c.l.b16 %v1260
    %v1369 = vunpack.c.l.b16 %v1261
    %v1370 = vunpack.c.l.b16 %v1262
    %v1371 = vunpack.c.l.b16 %v1263
    %v1372 = vunpack.c.l.b16 %v1264
    %v1373 = vunpack.c.l.b16 %v1265
    %v1374 = vpack.c.b16 %v1367, %v1366
    %v1375 = vpack.c.b16 %v1369, %v1368
    %v1376 = vpack.c.b16 %v1371, %v1370
    %v1377 = vpack.c.b16 %v1373, %v1372
    %v1379 = vsel %vm205, %v1354, 0
    %v1382 = vsel %vm205, %v1374, 0
    %v1385 = vsel %vm205, %v1375, 0
    %v1388 = vsel %vm205, %v1376, 0
    %v1391 = vsel %vm205, %v1377, 0
    %1393 = vmatpush.bf16.xpose.msra.mxu0 0
    %1394 = vmatpush.bf16.xpose.msra.mxu0 0
    %1395 = vmatpush.bf16.xpose.msra.mxu0 0
    %1396 = vmatpush.bf16.xpose.msra.mxu0 0
    %1397 = vmatpush.bf16.xpose.msra.mxu0 %v1391
    %1398 = vmatpush.bf16.xpose.msra.mxu0 %v1388
    %1399 = vmatpush.bf16.xpose.msra.mxu0 %v1385
    %1400 = vmatpush.bf16.xpose.msra.mxu0 %v1382
    %1401 = vmatmul.bf16.gmra.mxu0 %v1379
    %v1402 = vpop.f32.mrf.mxu0
    %v1403 = vadd.f32 %v445, %v1402
    %v1404 = vpop.f32.mrf.mxu0
    %1405 = vdwg.mxu0
    %v1414 = vunpack.c.l.b16 %v1266
    %v1415 = vunpack.c.l.b16 %v1267
    %v1416 = vunpack.c.l.b16 %v1268
    %v1417 = vunpack.c.l.b16 %v1269
    %v1418 = vunpack.c.l.b16 %v1270
    %v1419 = vunpack.c.l.b16 %v1271
    %v1420 = vunpack.c.l.b16 %v1272
    %v1421 = vunpack.c.l.b16 %v1273
    %v1422 = vpack.c.b16 %v1415, %v1414
    %v1423 = vpack.c.b16 %v1417, %v1416
    %v1424 = vpack.c.b16 %v1419, %v1418
    %v1425 = vpack.c.b16 %v1421, %v1420
    %v1427 = vsel %vm205, %v1355, 0
    %v1430 = vsel %vm205, %v1422, 0
    %v1433 = vsel %vm205, %v1423, 0
    %v1436 = vsel %vm205, %v1424, 0
    %v1439 = vsel %vm205, %v1425, 0
    %1441 = vmatpush.bf16.xpose.msra.mxu0 0
    %1442 = vmatpush.bf16.xpose.msra.mxu0 0
    %1443 = vmatpush.bf16.xpose.msra.mxu0 0
    %1444 = vmatpush.bf16.xpose.msra.mxu0 0
    %1445 = vmatpush.bf16.xpose.msra.mxu0 %v1439
    %1446 = vmatpush.bf16.xpose.msra.mxu0 %v1436
    %1447 = vmatpush.bf16.xpose.msra.mxu0 %v1433
    %1448 = vmatpush.bf16.xpose.msra.mxu0 %v1430
    %1449 = vmatmul.bf16.gmra.mxu0 %v1427
    %v1450 = vpop.f32.mrf.mxu0
    %v1451 = vadd.f32 %v446, %v1450
    %v1452 = vpop.f32.mrf.mxu0
    %1453 = vdwg.mxu0
    %v1462 = vunpack.c.l.b16 %v1274
    %v1463 = vunpack.c.l.b16 %v1275
    %v1464 = vunpack.c.l.b16 %v1276
    %v1465 = vunpack.c.l.b16 %v1277
    %v1466 = vunpack.c.l.b16 %v1278
    %v1467 = vunpack.c.l.b16 %v1279
    %v1468 = vunpack.c.l.b16 %v1280
    %v1469 = vunpack.c.l.b16 %v1281
    %v1470 = vpack.c.b16 %v1463, %v1462
    %v1471 = vpack.c.b16 %v1465, %v1464
    %v1472 = vpack.c.b16 %v1467, %v1466
    %v1473 = vpack.c.b16 %v1469, %v1468
    %v1475 = vsel %vm205, %v1356, 0
    %v1478 = vsel %vm205, %v1470, 0
    %v1481 = vsel %vm205, %v1471, 0
    %v1484 = vsel %vm205, %v1472, 0
    %v1487 = vsel %vm205, %v1473, 0
    %1489 = vmatpush.bf16.xpose.msra.mxu0 0
    %1490 = vmatpush.bf16.xpose.msra.mxu0 0
    %1491 = vmatpush.bf16.xpose.msra.mxu0 0
    %1492 = vmatpush.bf16.xpose.msra.mxu0 0
    %1493 = vmatpush.bf16.xpose.msra.mxu0 %v1487
    %1494 = vmatpush.bf16.xpose.msra.mxu0 %v1484
    %1495 = vmatpush.bf16.xpose.msra.mxu0 %v1481
    %1496 = vmatpush.bf16.xpose.msra.mxu0 %v1478
    %1497 = vmatmul.bf16.gmra.mxu0 %v1475
    %v1498 = vpop.f32.mrf.mxu0
    %v1499 = vadd.f32 %v447, %v1498
    %v1500 = vpop.f32.mrf.mxu0
    %1501 = vdwg.mxu0
    %v1510 = vunpack.c.l.b16 %v1282
    %v1511 = vunpack.c.l.b16 %v1283
    %v1512 = vunpack.c.l.b16 %v1284
    %v1513 = vunpack.c.l.b16 %v1285
    %v1514 = vunpack.c.l.b16 %v1286
    %v1515 = vunpack.c.l.b16 %v1287
    %v1516 = vunpack.c.l.b16 %v1288
    %v1517 = vunpack.c.l.b16 %v1289
    %v1518 = vpack.c.b16 %v1511, %v1510
    %v1519 = vpack.c.b16 %v1513, %v1512
    %v1520 = vpack.c.b16 %v1515, %v1514
    %v1521 = vpack.c.b16 %v1517, %v1516
    %v1523 = vsel %vm205, %v1357, 0
    %v1526 = vsel %vm205, %v1518, 0
    %v1529 = vsel %vm205, %v1519, 0
    %v1532 = vsel %vm205, %v1520, 0
    %v1535 = vsel %vm205, %v1521, 0
    %1537 = vmatpush.bf16.xpose.msra.mxu0 0
    %1538 = vmatpush.bf16.xpose.msra.mxu0 0
    %1539 = vmatpush.bf16.xpose.msra.mxu0 0
    %1540 = vmatpush.bf16.xpose.msra.mxu0 0
    %1541 = vmatpush.bf16.xpose.msra.mxu0 %v1535
    %1542 = vmatpush.bf16.xpose.msra.mxu0 %v1532
    %1543 = vmatpush.bf16.xpose.msra.mxu0 %v1529
    %1544 = vmatpush.bf16.xpose.msra.mxu0 %v1526
    %1545 = vmatmul.bf16.gmra.mxu0 %v1523
    %v1546 = vpop.f32.mrf.mxu0
    %v1547 = vadd.f32 %v448, %v1546
    %v1548 = vpop.f32.mrf.mxu0
    %1549 = vdwg.mxu0
    %v1550 = vsel %vm645, %v1403, -inf
    %1551 = vmax.xlane.f32.xlu0 %v1550
    %v1552 = vpop.xlane.xlu0 %1551
    %v1553 = vsel %vm645, %v1451, -inf
    %1554 = vmax.xlane.f32.xlu0 %v1553
    %v1555 = vpop.xlane.xlu0 %1554
    %v1556 = vsel %vm645, %v1499, -inf
    %1557 = vmax.xlane.f32.xlu0 %v1556
    %v1558 = vpop.xlane.xlu0 %1557
    %v1559 = vsel %vm645, %v1547, -inf
    %1560 = vmax.xlane.f32.xlu0 %v1559
    %v1561 = vpop.xlane.xlu0 %1560
    %v1562 = vsub.f32 %v1403, %v1552
    %v1563 = vsub.f32 %v1451, %v1555
    %v1564 = vsub.f32 %v1499, %v1558
    %v1565 = vsub.f32 %v1547, %v1561
    %v1566 = vmul.f32 %v1562, 1.442695
    %v1567 = vpow.pop %v1566
    %v1568 = vmul.f32 %v1563, 1.442695
    %v1569 = vpow.pop %v1568
    %v1570 = vmul.f32 %v1564, 1.442695
    %v1571 = vpow.pop %v1570
    %v1572 = vmul.f32 %v1565, 1.442695
    %v1573 = vpow.pop %v1572
    %v1574 = vpack.c.bf16 %v1567, %v1567
    %v1575 = vpack.c.bf16 %v1569, %v1569
    %v1576 = vpack.c.bf16 %v1571, %v1571
    %v1577 = vpack.c.bf16 %v1573, %v1573
    %v1586 = vunpack.c.l.b16 %v1322
    %v1587 = vunpack.c.l.b16 %v1323
    %v1588 = vunpack.c.l.b16 %v1324
    %v1589 = vunpack.c.l.b16 %v1325
    %v1590 = vunpack.c.l.b16 %v1326
    %v1591 = vunpack.c.l.b16 %v1327
    %v1592 = vunpack.c.l.b16 %v1328
    %v1593 = vunpack.c.l.b16 %v1329
    %v1594 = vpack.c.b16 %v1587, %v1586
    %v1595 = vpack.c.b16 %v1589, %v1588
    %v1596 = vpack.c.b16 %v1591, %v1590
    %v1597 = vpack.c.b16 %v1593, %v1592
    %v1603 = vsel %vm645, %v1574, 0
    %1605 = vmatpush.bf16.msra.mxu0 0
    %1606 = vmatpush.bf16.msra.mxu0 0
    %1607 = vmatpush.bf16.msra.mxu0 0
    %1608 = vmatpush.bf16.msra.mxu0 0
    %1609 = vmatpush.bf16.msra.mxu0 %v1597
    %1610 = vmatpush.bf16.msra.mxu0 %v1596
    %1611 = vmatpush.bf16.msra.mxu0 %v1595
    %1612 = vmatpush.bf16.msra.mxu0 %v1594
    %1613 = vmatmul.bf16.gmra.mxu0 %v1603
    %v1614 = vpop.f32.mrf.mxu0
    %v1615 = vadd.f32 0.0, %v1614
    %v1616 = vpop.f32.mrf.mxu0
    %1617 = vdwg.mxu0
    %v1626 = vunpack.c.l.b16 %v1330
    %v1627 = vunpack.c.l.b16 %v1331
    %v1628 = vunpack.c.l.b16 %v1332
    %v1629 = vunpack.c.l.b16 %v1333
    %v1630 = vunpack.c.l.b16 %v1334
    %v1631 = vunpack.c.l.b16 %v1335
    %v1632 = vunpack.c.l.b16 %v1336
    %v1633 = vunpack.c.l.b16 %v1337
    %v1634 = vpack.c.b16 %v1627, %v1626
    %v1635 = vpack.c.b16 %v1629, %v1628
    %v1636 = vpack.c.b16 %v1631, %v1630
    %v1637 = vpack.c.b16 %v1633, %v1632
    %v1643 = vsel %vm645, %v1575, 0
    %1645 = vmatpush.bf16.msra.mxu0 0
    %1646 = vmatpush.bf16.msra.mxu0 0
    %1647 = vmatpush.bf16.msra.mxu0 0
    %1648 = vmatpush.bf16.msra.mxu0 0
    %1649 = vmatpush.bf16.msra.mxu0 %v1637
    %1650 = vmatpush.bf16.msra.mxu0 %v1636
    %1651 = vmatpush.bf16.msra.mxu0 %v1635
    %1652 = vmatpush.bf16.msra.mxu0 %v1634
    %1653 = vmatmul.bf16.gmra.mxu0 %v1643
    %v1654 = vpop.f32.mrf.mxu0
    %v1655 = vadd.f32 0.0, %v1654
    %v1656 = vpop.f32.mrf.mxu0
    %1657 = vdwg.mxu0
    %v1666 = vunpack.c.l.b16 %v1338
    %v1667 = vunpack.c.l.b16 %v1339
    %v1668 = vunpack.c.l.b16 %v1340
    %v1669 = vunpack.c.l.b16 %v1341
    %v1670 = vunpack.c.l.b16 %v1342
    %v1671 = vunpack.c.l.b16 %v1343
    %v1672 = vunpack.c.l.b16 %v1344
    %v1673 = vunpack.c.l.b16 %v1345
    %v1674 = vpack.c.b16 %v1667, %v1666
    %v1675 = vpack.c.b16 %v1669, %v1668
    %v1676 = vpack.c.b16 %v1671, %v1670
    %v1677 = vpack.c.b16 %v1673, %v1672
    %v1683 = vsel %vm645, %v1576, 0
    %1685 = vmatpush.bf16.msra.mxu0 0
    %1686 = vmatpush.bf16.msra.mxu0 0
    %1687 = vmatpush.bf16.msra.mxu0 0
    %1688 = vmatpush.bf16.msra.mxu0 0
    %1689 = vmatpush.bf16.msra.mxu0 %v1677
    %1690 = vmatpush.bf16.msra.mxu0 %v1676
    %1691 = vmatpush.bf16.msra.mxu0 %v1675
    %1692 = vmatpush.bf16.msra.mxu0 %v1674
    %1693 = vmatmul.bf16.gmra.mxu0 %v1683
    %v1694 = vpop.f32.mrf.mxu0
    %v1695 = vadd.f32 0.0, %v1694
    %v1696 = vpop.f32.mrf.mxu0
    %1697 = vdwg.mxu0
    %v1706 = vunpack.c.l.b16 %v1346
    %v1707 = vunpack.c.l.b16 %v1347
    %v1708 = vunpack.c.l.b16 %v1348
    %v1709 = vunpack.c.l.b16 %v1349
    %v1710 = vunpack.c.l.b16 %v1350
    %v1711 = vunpack.c.l.b16 %v1351
    %v1712 = vunpack.c.l.b16 %v1352
    %v1713 = vunpack.c.l.b16 %v1353
    %v1714 = vpack.c.b16 %v1707, %v1706
    %v1715 = vpack.c.b16 %v1709, %v1708
    %v1716 = vpack.c.b16 %v1711, %v1710
    %v1717 = vpack.c.b16 %v1713, %v1712
    %v1723 = vsel %vm645, %v1577, 0
    %1725 = vmatpush.bf16.msra.mxu0 0
    %1726 = vmatpush.bf16.msra.mxu0 0
    %1727 = vmatpush.bf16.msra.mxu0 0
    %1728 = vmatpush.bf16.msra.mxu0 0
    %1729 = vmatpush.bf16.msra.mxu0 %v1717
    %1730 = vmatpush.bf16.msra.mxu0 %v1716
    %1731 = vmatpush.bf16.msra.mxu0 %v1715
    %1732 = vmatpush.bf16.msra.mxu0 %v1714
    %1733 = vmatmul.bf16.gmra.mxu0 %v1723
    %v1734 = vpop.f32.mrf.mxu0
    %v1735 = vadd.f32 0.0, %v1734
    %v1736 = vpop.f32.mrf.mxu0
    %1737 = vdwg.mxu0
    %v1738 = vpack.c.bf16 %v1569, %v1567
    %v1739 = vpack.c.bf16 %v1573, %v1571
    %v1741 = vsel %vm645, %v1738, 0
    %v1744 = vsel %vm645, %v1739, 0
    %1746 = vmatpush.bf16.msra.mxu0 0
    %1747 = vmatpush.bf16.msra.mxu0 0
    %1748 = vmatpush.bf16.msra.mxu0 0
    %1749 = vmatpush.bf16.msra.mxu0 0
    %1750 = vmatpush.bf16.msra.mxu0 %v855
    %1751 = vmatpush.bf16.msra.mxu0 %v854
    %1752 = vmatpush.bf16.msra.mxu0 %v853
    %1753 = vmatpush.bf16.msra.mxu0 %v852
    %1754 = vmatmul.bf16.gmra.mxu0 %v1741
    %v1755 = vpop.f32.mrf.mxu0
    %v1756 = vadd.f32 0.0, %v1755
    %v1757 = vpop.f32.mrf.mxu0
    %v1758 = vadd.f32 0.0, %v1757
    %1759 = vmatmul.bf16.gmra.mxu0 %v1744
    %v1760 = vpop.f32.mrf.mxu0
    %v1761 = vadd.f32 0.0, %v1760
    %v1762 = vpop.f32.mrf.mxu0
    %v1763 = vadd.f32 0.0, %v1762
    %1764 = vdwg.mxu0
    %v1766 = vsel %vm885, %v1756, 0
    %v1769 = vsel %vm885, %v1758, 0
    %v1772 = vsel %vm885, %v1761, 0
    %v1775 = vsel %vm885, %v1763, 0
    %1777 = vmatpush.msra.mxu0 0.0
    %1778 = vmatpush.msra.mxu0 0.0
    %1779 = vmatpush.msra.mxu0 0.0
    %1780 = vmatpush.msra.mxu0 0.0
    %1781 = vmatpush.msra.mxu0 0.0
    %1782 = vmatpush.msra.mxu0 0.0
    %1783 = vmatpush.msra.mxu0 0.0
    %1784 = vmatpush.msra.mxu0 0.0
    %1785 = vmatpush.msra.mxu0 0.0
    %1786 = vmatpush.msra.mxu0 0.0
    %1787 = vmatpush.msra.mxu0 0.0
    %1788 = vmatpush.msra.mxu0 0.0
    %1789 = vmatpush.msra.mxu0 0.0
    %1790 = vmatpush.msra.mxu0 0.0
    %1791 = vmatpush.msra.mxu0 0.0
    %1792 = vmatpush.msra.mxu0 %v180
    %1793 = vmatmul.f32.gmra.mxu0 %v1766
    %v1794 = vpop.f32.mrf.mxu0
    %v1795 = vadd.f32 0.0, %v1794
    %1796 = vmatmul.f32.gmra.mxu0 %v1769
    %v1797 = vpop.f32.mrf.mxu0
    %v1798 = vadd.f32 0.0, %v1797
    %1799 = vmatmul.f32.gmra.mxu0 %v1772
    %v1800 = vpop.f32.mrf.mxu0
    %v1801 = vadd.f32 0.0, %v1800
    %1802 = vmatmul.f32.gmra.mxu0 %v1775
    %v1803 = vpop.f32.mrf.mxu0
    %v1804 = vadd.f32 0.0, %v1803
    %1805 = vdwg.mxu0
    %v1806 = vrcp.pop %v1795
    %v1807 = vrcp.pop %v1798
    %v1808 = vrcp.pop %v1801
    %v1809 = vrcp.pop %v1804
    %v1810 = vmul.f32 %v1615, %v1806
    %v1811 = vmul.f32 %v1655, %v1807
    %v1812 = vmul.f32 %v1695, %v1808
    %v1813 = vmul.f32 %v1735, %v1809
    %v1814 = vpack.c.bf16 %v1811, %v1810
    %v1815 = vpack.c.bf16 %v1813, %v1812
    %s1816 = scalar_lea.vmem %s13, 16
    %v1817 = vld [vmem:[%s1816] sm:$0xf]
    %v1818 = vld [vmem:[%s1816 + $0x4] sm:$0xf]
    %v1819 = vld [vmem:[%s1816 + $0x8] sm:$0xf]
    %v1820 = vld [vmem:[%s1816 + $0xc] sm:$0xf]
    %s1821 = scalar_lea.vmem %s14, 1
    %v1822 = vld [vmem:[%s1821] sm:$0x1]
    %v1824 = vperm.slane %v1822, 0
    %v1830 = vunpack.c.l.b16 %v1817
    %v1831 = vunpack.c.l.b16 %v1818
    %v1832 = vunpack.c.l.b16 %v1819
    %v1833 = vunpack.c.l.b16 %v1820
    %v1834 = vpack.c.b16 %v1831, %v1830
    %v1835 = vpack.c.b16 %v1833, %v1832
    %v1839 = vsel %vm205, %v1814, 0
    %v1842 = vsel %vm205, %v1815, 0
    %1844 = vmatpush.bf16.msra.mxu0 0
    %1845 = vmatpush.bf16.msra.mxu0 0
    %1846 = vmatpush.bf16.msra.mxu0 0
    %1847 = vmatpush.bf16.msra.mxu0 0
    %1848 = vmatpush.bf16.msra.mxu0 0
    %1849 = vmatpush.bf16.msra.mxu0 0
    %1850 = vmatpush.bf16.msra.mxu0 %v1835
    %1851 = vmatpush.bf16.msra.mxu0 %v1834
    %1852 = vmatmul.bf16.gmra.mxu0 %v1839
    %v1853 = vpop.f32.mrf.mxu0
    %v1854 = vadd.f32 %v1824, %v1853
    %v1855 = vpop.f32.mrf.mxu0
    %v1856 = vadd.f32 %v1824, %v1855
    %1857 = vmatmul.bf16.gmra.mxu0 %v1842
    %v1858 = vpop.f32.mrf.mxu0
    %v1859 = vadd.f32 %v1824, %v1858
    %v1860 = vpop.f32.mrf.mxu0
    %v1861 = vadd.f32 %v1824, %v1860
    %1862 = vdwg.mxu0
    %v1863 = vadd.f32 %v1854, %v1091
    %v1864 = vadd.f32 %v1856, %v1092
    %v1865 = vadd.f32 %v1859, %v1093
    %v1866 = vadd.f32 %v1861, %v1094
    %v1867 = vsel %vm205, %v1863, 0.0
    %1868 = vadd.xlane.f32.xlu0 %v1867
    %v1869 = vpop.xlane.xlu0 %1868
    %v1870 = vsel %vm205, %v1864, 0.0
    %1871 = vadd.xlane.f32.xlu0 %v1870
    %v1872 = vpop.xlane.xlu0 %1871
    %v1873 = vsel %vm205, %v1865, 0.0
    %1874 = vadd.xlane.f32.xlu0 %v1873
    %v1875 = vpop.xlane.xlu0 %1874
    %v1876 = vsel %vm205, %v1866, 0.0
    %1877 = vadd.xlane.f32.xlu0 %v1876
    %v1878 = vpop.xlane.xlu0 %1877
    %v1879 = vmul.f32 %v1869, %v1004
    %v1880 = vmul.f32 %v1872, %v1004
    %v1881 = vmul.f32 %v1875, %v1004
    %v1882 = vmul.f32 %v1878, %v1004
    %v1883 = vsub.f32 %v1863, %v1879
    %v1884 = vsub.f32 %v1864, %v1880
    %v1885 = vsub.f32 %v1865, %v1881
    %v1886 = vsub.f32 %v1866, %v1882
    %v1887 = vmul.f32 %v1883, %v1883
    %v1888 = vmul.f32 %v1884, %v1884
    %v1889 = vmul.f32 %v1885, %v1885
    %v1890 = vmul.f32 %v1886, %v1886
    %v1891 = vsel %vm205, %v1887, 0.0
    %1892 = vadd.xlane.f32.xlu0 %v1891
    %v1893 = vpop.xlane.xlu0 %1892
    %v1894 = vsel %vm205, %v1888, 0.0
    %1895 = vadd.xlane.f32.xlu0 %v1894
    %v1896 = vpop.xlane.xlu0 %1895
    %v1897 = vsel %vm205, %v1889, 0.0
    %1898 = vadd.xlane.f32.xlu0 %v1897
    %v1899 = vpop.xlane.xlu0 %1898
    %v1900 = vsel %vm205, %v1890, 0.0
    %1901 = vadd.xlane.f32.xlu0 %v1900
    %v1902 = vpop.xlane.xlu0 %1901
    %v1903 = vmul.f32 %v1893, %v1004
    %v1904 = vmul.f32 %v1896, %v1004
    %v1905 = vmul.f32 %v1899, %v1004
    %v1906 = vmul.f32 %v1902, %v1004
    %v1907 = vadd.f32 %v1903, 1e-05
    %v1908 = vadd.f32 %v1904, 1e-05
    %v1909 = vadd.f32 %v1905, 1e-05
    %v1910 = vadd.f32 %v1906, 1e-05
    %v1911 = vrsqrt.pop %v1907
    %v1912 = vmul.f32 %v1911, %v1907
    %v1913 = vmul.f32 %v1912, %v1911
    %v1914 = vmul.f32 0.5, %v1913
    %v1915 = vsub.f32 1.5, %v1914
    %v1916 = vmul.f32 %v1911, %v1915
    %vm1917 = vweird.f32 %v1907
    %vm1918 = vweird.f32 %v1911
    %vm1919 = vmor %vm1917, %vm1918
    %v1920 = vsel %vm1919, %v1911, %v1916
    %v1921 = vrsqrt.pop %v1908
    %v1922 = vmul.f32 %v1921, %v1908
    %v1923 = vmul.f32 %v1922, %v1921
    %v1924 = vmul.f32 0.5, %v1923
    %v1925 = vsub.f32 1.5, %v1924
    %v1926 = vmul.f32 %v1921, %v1925
    %vm1927 = vweird.f32 %v1908
    %vm1928 = vweird.f32 %v1921
    %vm1929 = vmor %vm1927, %vm1928
    %v1930 = vsel %vm1929, %v1921, %v1926
    %v1931 = vrsqrt.pop %v1909
    %v1932 = vmul.f32 %v1931, %v1909
    %v1933 = vmul.f32 %v1932, %v1931
    %v1934 = vmul.f32 0.5, %v1933
    %v1935 = vsub.f32 1.5, %v1934
    %v1936 = vmul.f32 %v1931, %v1935
    %vm1937 = vweird.f32 %v1909
    %vm1938 = vweird.f32 %v1931
    %vm1939 = vmor %vm1937, %vm1938
    %v1940 = vsel %vm1939, %v1931, %v1936
    %v1941 = vrsqrt.pop %v1910
    %v1942 = vmul.f32 %v1941, %v1910
    %v1943 = vmul.f32 %v1942, %v1941
    %v1944 = vmul.f32 0.5, %v1943
    %v1945 = vsub.f32 1.5, %v1944
    %v1946 = vmul.f32 %v1941, %v1945
    %vm1947 = vweird.f32 %v1910
    %vm1948 = vweird.f32 %v1941
    %vm1949 = vmor %vm1947, %vm1948
    %v1950 = vsel %vm1949, %v1941, %v1946
    %v1951 = vmul.f32 %v1883, %v1920
    %v1952 = vmul.f32 %v1884, %v1930
    %v1953 = vmul.f32 %v1885, %v1940
    %v1954 = vmul.f32 %v1886, %v1950
    %v1955 = vmul.f32 %v1951, %v1082
    %v1956 = vmul.f32 %v1952, %v1082
    %v1957 = vmul.f32 %v1953, %v1082
    %v1958 = vmul.f32 %v1954, %v1082
    %v1959 = vadd.f32 %v1955, %v1089
    %v1960 = vadd.f32 %v1956, %v1089
    %v1961 = vadd.f32 %v1957, %v1089
    %v1962 = vadd.f32 %v1958, %v1089
    %v1963 = vsel %vm205, %v1959, 0.0
    %v1964 = vrot.slane %v1963, 4
    %v1965 = vadd.f32 %v1963, %v1964
    %v1966 = vrot.slane %v1965, 2
    %v1967 = vadd.f32 %v1965, %v1966
    %v1968 = vrot.slane %v1967, 1
    %v1969 = vadd.f32 %v1967, %v1968
    %v1970 = vsel %vm205, %v1960, 0.0
    %v1971 = vrot.slane %v1970, 4
    %v1972 = vadd.f32 %v1970, %v1971
    %v1973 = vrot.slane %v1972, 2
    %v1974 = vadd.f32 %v1972, %v1973
    %v1975 = vrot.slane %v1974, 1
    %v1976 = vadd.f32 %v1974, %v1975
    %v1977 = vsel %vm205, %v1961, 0.0
    %v1978 = vrot.slane %v1977, 4
    %v1979 = vadd.f32 %v1977, %v1978
    %v1980 = vrot.slane %v1979, 2
    %v1981 = vadd.f32 %v1979, %v1980
    %v1982 = vrot.slane %v1981, 1
    %v1983 = vadd.f32 %v1981, %v1982
    %v1984 = vsel %vm205, %v1962, 0.0
    %v1985 = vrot.slane %v1984, 4
    %v1986 = vadd.f32 %v1984, %v1985
    %v1987 = vrot.slane %v1986, 2
    %v1988 = vadd.f32 %v1986, %v1987
    %v1989 = vrot.slane %v1988, 1
    %v1990 = vadd.f32 %v1988, %v1989
    %v1991 = vrcp.pop 8.0
    %v1992 = vmul.f32 8.0, %v1991
    %v1993 = vsub.f32 1.0, %v1992
    %v1994 = vmul.f32 %v1991, %v1993
    %v1995 = vadd.f32 %v1991, %v1994
    %vm1996 = vweird.f32 %v1991
    %v1997 = vsel %vm1996, %v1991, %v1995
    %v1998 = vmul.f32 %v1969, %v1997
    %v1999 = vmul.f32 %v1976, %v1997
    %v2000 = vmul.f32 %v1983, %v1997
    %v2001 = vmul.f32 %v1990, %v1997
    %v2002 = vld [vmem:[%s17] sm:$0x1]
    %v2003 = vpack.c.bf16 %v1998, %v1998
    %v2004 = vpack.c.bf16 %v1999, %v1999
    %v2005 = vpack.c.bf16 %v2000, %v2000
    %v2006 = vpack.c.bf16 %v2001, %v2001
    %v2007 = vld [vmem:[#allocation2] sm:$0x1]
    %2009 = vset.pattern.permute.xlu0 0
    %2010 = vperm.xlu0 %2009, %v2007
    %v2011 = vpop.permute.xlu0 %2010
    %v2013 = vperm.slane %v2011, 0
    %v2018 = vunpack.c.l.b16 %v2003
    %v2019 = vunpack.c.l.b16 %v2004
    %v2020 = vunpack.c.l.b16 %v2005
    %v2021 = vunpack.c.l.b16 %v2006
    %vm2022 = vcmask 1041409
    %v2023 = vsel %vm2022, %v2019, %v2018
    %vm2024 = vcmask 1042434
    %v2025 = vsel %vm2024, %v2020, %v2023
    %vm2026 = vcmask 1043459
    %v2027 = vsel %vm2026, %v2021, %v2025
    %v2028 = vpack.c.b16 %v2027, %v2027
    %v2030 = vsel %vm205, %v2002, 0
    %v2033 = vsel %vm205, %v2028, 0
    %2035 = vmatpush.bf16.xpose.msra.mxu0 0
    %2036 = vmatpush.bf16.xpose.msra.mxu0 0
    %2037 = vmatpush.bf16.xpose.msra.mxu0 0
    %2038 = vmatpush.bf16.xpose.msra.mxu0 0
    %2039 = vmatpush.bf16.xpose.msra.mxu0 0
    %2040 = vmatpush.bf16.xpose.msra.mxu0 0
    %2041 = vmatpush.bf16.xpose.msra.mxu0 0
    %2042 = vmatpush.bf16.xpose.msra.mxu0 %v2033
    %2043 = vmatmul.bf16.gmra.mxu0 %v2030
    %v2044 = vpop.f32.mrf.mxu0
    %v2045 = vadd.f32 %v2013, %v2044
    %v2046 = vpop.f32.mrf.mxu0
    %2047 = vdwg.mxu0
    %vm2048 = vcmask 24576
    %2049 = vst.msk [vmem:[#allocation3] sm:$0x1] %vm2048, %v2045
    // Predicated region
    $region78: #{tpu_custom_call.1} parent=1 // pred_check
      _
    $region79: #{tpu_custom_call.1} parent=1 // pred_check_branch
      %2051 = sbr.rel (0) target = $region81
    $region80: #{tpu_custom_call.1} parent=1 // pred_region
      %2053 = vsyncadd [#allocation4], 0
      %s2055 = sshll.u32 [#allocation3], 4
      %s2056 = int_to_ptr.vmem [resolvable:$true] %s2055
      %s2057 = sshll.u32 %s19, 4
      %s2058 = int_to_ptr.hbm [resolvable:$true] %s2057
      %2060 = dma.vmem_to_hbm [thread:$0]  %s2056, 16, %s2058, [#allocation4]
    $region81: #{tpu_custom_call.1} parent=1 // pred_fallthru
      _
    // Predicated region
    $region82: #{tpu_custom_call.1} parent=1 // pred_check
      _
    $region83: #{tpu_custom_call.1} parent=1 // pred_check_branch
      %2062 = sbr.rel (0) target = $region85
    $region84: #{tpu_custom_call.1} parent=1 // pred_region
      %2064 = dma.done [#allocation4], 16
    $region85: #{tpu_custom_call.1} parent=1 // pred_fallthru
      _
    %2065 = vsyncpa [#allocation4], 1

</llo_original>
